<compile_context>
chip_gen: v5e
topology: v5e:2x2
jax: 0.10.0
libtpu: 0.0.40
codegen_flags: <defaults>
</compile_context>

<pallas_src>
import functools

import jax
import jax.numpy as jnp
from jax.experimental import pallas as pl
from jax.experimental.pallas import tpu as pltpu


# ----------------------------------------------------------------------------
# Pallas kernel: fused multi-layer LightGCN propagation + layer mean
# ----------------------------------------------------------------------------
def _lightgcn_kernel(a_ref, e0_hbm, o_ref,
                     x_buf, sum_acc, tile_acc,
                     *, num_layers, tm, tk, kt, a_resident):
    l = pl.program_id(0)                     # layer            (outermost)
    i = pl.program_id(1)                     # destination-row tile
    k = pl.program_id(2)                     # reduction tile   (innermost)
    last_k = k == pl.num_programs(2) - 1

    row0 = pl.multiple_of(i * tm, tm)        # rows of x_{l+1} / sum owned here
    col0 = pl.multiple_of(k * tk, tk)        # rows of x_l consumed this K step

    cur = l % 2                              # slot holding x_l
    nxt = (l + 1) % 2                        # slot receiving x_{l+1}

    # One-time seeding at the very first grid step: DMA the exact f32 E0 from
    # HBM into the running layer sum, then cast it into x slot 0.  E0 never
    # occupies a pipelined VMEM block.
    @pl.when(jnp.logical_and(l == 0, jnp.logical_and(i == 0, k == 0)))
    def _():
        pltpu.sync_copy(e0_hbm, sum_acc)
        x_buf[0] = sum_acc[...].astype(x_buf.dtype)

    # A tile for this (i, k): sliced from the VMEM-resident copy (small-graph
    # fast path) or the streamed pipelined (tm, tk) block.
    if a_resident:
        a_tile = a_ref[i * kt + k]
    else:
        a_tile = a_ref[...]

    # MXU step: bf16 (tm, tk) @ bf16 (tk, D_pad) -> f32.  The K accumulator's
    # zeroing is folded into the first K step (no separate zero-fill pass).
    # TODO(synk): keep x_buf in f32 on v5e/v6e if tighter accuracy is needed
    # (bf16 recommit compounds rounding across layers).
    partial = jnp.dot(a_tile, x_buf[cur, pl.ds(col0, tk), :],
                      preferred_element_type=jnp.float32)

    @pl.when(k == 0)
    def _():
        tile_acc[...] = partial

    @pl.when(k > 0)
    def _():
        tile_acc[...] += partial

    # End of the K reduction for this (layer, row tile): fold x_{l+1} rows
    # into the f32 layer sum ...
    @pl.when(last_k)
    def _():
        sum_acc[pl.ds(row0, tm), :] += tile_acc[...]

    # ... commit them (bf16) into the other x slot (skipped on the last layer,
    # where x_{L} is never read again) ...
    @pl.when(jnp.logical_and(last_k, l < num_layers - 1))
    def _():
        x_buf[nxt, pl.ds(row0, tm), :] = tile_acc[...].astype(x_buf.dtype)

    # ... and, on the final layer, emit the layer mean for this row tile
    # (single reciprocal multiply, lane-dense (tm, D_pad) f32 store).
    @pl.when(jnp.logical_and(last_k, l == num_layers - 1))
    def _():
        o_ref[...] = sum_acc[pl.ds(row0, tm), :] * (1.0 / float(num_layers + 1))


# ----------------------------------------------------------------------------
# Wrapper: padding, tiling, VMEM planning, pallas_call
# ----------------------------------------------------------------------------
def _round_up(x, m):
    return ((x + m - 1) // m) * m


def _pick_tile(n, cap):
    """Largest power-of-two multiple of 128 <= min(cap, round_up(n, 128))."""
    limit = min(cap, _round_up(n, 128))
    t = 128
    while t * 2 <= limit:
        t *= 2
    return t


def _vmem_limit_bytes():
    """Generation-aware scoped-VMEM cap (~0.75 of physical VMEM per core)."""
    cap = None
    try:
        info = pltpu.get_tpu_info()
        cap = getattr(info, "vmem_capacity_bytes", None)
    except Exception:
        cap = None
    if not cap:
        cap = 64 * 1024 * 1024            # conservative default = v7x physical
    return max(32 * 1024 * 1024, int(0.75 * int(cap)))


def _spec(block_shape, index_map, *, buffers=None):
    """BlockSpec with an optional pipeline depth (graceful fallback)."""
    if buffers is not None:
        try:
            return pl.BlockSpec(block_shape, index_map,
                                pipeline_mode=pl.Buffered(buffers))
        except Exception:
            pass
    return pl.BlockSpec(block_shape, index_map)


def lightgcn_forward(a_hat, e0, num_layers=3, *, tm=None, tk=None,
                     a_resident=None):
    """Fused LightGCN propagation + layer mean. Returns (E0, E) like the module."""
    assert num_layers >= 1
    n, d = e0.shape
    d_pad = _round_up(d, 128)
    if tm is None:
        tm = _pick_tile(n, 512)                       # raised caps (review #1)
    if tk is None:
        tk = _pick_tile(n, 2048 if n >= 8192 else 1024)
    n_pad = _round_up(n, max(tm, tk))                 # tm, tk = 128 * 2^a
    mt, kt = n_pad // tm, n_pad // tk

    vmem_limit = _vmem_limit_bytes()

    # VMEM budget (conservative: assumes default double-buffering everywhere).
    base_bytes = (2 * n_pad * d_pad * 2     # x slots (bf16, one (2, N, D) buffer)
                  + n_pad * d_pad * 4       # running layer sum (f32)
                  + tm * d_pad * 4          # K-reduction accumulator (f32)
                  + 2 * tm * d_pad * 4)     # double-buffered out block (f32)
    a_res_bytes = 2 * n_pad * n_pad * 2     # resident bf16 A, worst-case 2 bufs
    if a_resident is None:
        a_resident = base_bytes + a_res_bytes <= int(0.85 * vmem_limit)

    # bf16 A halves the dominant HBM stream; pre-tiled so every (tm, tk) tile
    # is one contiguous DMA.  E0 stays f32 (exact layer-0 term of the mean).
    a_p = jnp.pad(a_hat.astype(jnp.float32),
                  ((0, n_pad - n), (0, n_pad - n))).astype(jnp.bfloat16)
    a_tiled = (a_p.reshape(mt, tm, kt, tk)
                  .transpose(0, 2, 1, 3)
                  .reshape(mt * kt, tm, tk))
    e0_p = jnp.pad(e0.astype(jnp.float32), ((0, n_pad - n), (0, d_pad - d)))

    if a_resident:
        # Small-graph fast path: whole pre-tiled A lives in VMEM for the whole
        # grid -> A's HBM traffic is paid once instead of once per layer.
        a_spec = pl.BlockSpec((mt * kt, tm, tk), lambda l, i, k: (0, 0, 0))
    else:
        # Streamed path: one contiguous (tm, tk) tile per grid step, 3-deep
        # pipelining to hide the last_k epilogue and DMA jitter.
        a_spec = _spec((None, tm, tk), lambda l, i, k: (i * kt + k, 0, 0),
                       buffers=3)

    grid = (num_layers, mt, kt)

    e_pad = pl.pallas_call(
        functools.partial(_lightgcn_kernel, num_layers=num_layers,
                          tm=tm, tk=tk, kt=kt, a_resident=a_resident),
        out_shape=jax.ShapeDtypeStruct((n_pad, d_pad), jnp.float32),
        grid_spec=pltpu.PrefetchScalarGridSpec(
            num_scalar_prefetch=0,
            grid=grid,
            in_specs=[
                a_spec,
                # E0 stays in HBM (no pipelined VMEM block); DMA'd once into
                # the layer-sum scratch at the first grid step.
                pl.BlockSpec(memory_space=pl.ANY),
            ],
            out_specs=pl.BlockSpec((tm, d_pad), lambda l, i, k: (i, 0)),
            scratch_shapes=[
                pltpu.VMEM((2, n_pad, d_pad), jnp.bfloat16),  # x_l / x_{l+1}
                pltpu.VMEM((n_pad, d_pad), jnp.float32),      # running layer sum
                pltpu.VMEM((tm, d_pad), jnp.float32),         # K accumulator
            ],
        ),
        compiler_params=pltpu.CompilerParams(
            # Layer and row-tile axes both carry dependencies through the
            # VMEM-resident x / sum scratch, so no axis can be megacore
            # "parallel" in this fused single-core form.
            dimension_semantics=("arbitrary", "arbitrary", "arbitrary"),
            vmem_limit_bytes=vmem_limit,
        ),
    )(a_tiled, e0_p)

    e = e_pad[:n, :d].astype(e0.dtype)
    return e0, e


# ----------------------------------------------------------------------------
# Glue (plain JAX): dense normalized adjacency from edge_index, xavier init.
# ----------------------------------------------------------------------------
def build_normalized_adjacency(edge_index, num_nodes):
    src, dst = edge_index[0], edge_index[1]
    ones = jnp.ones(src.shape[0], dtype=jnp.float32)
    deg = jnp.zeros((num_nodes,), jnp.float32).at[dst].add(ones)
    dinv_sqrt = jnp.where(deg > 0, 1.0 / jnp.sqrt(deg), 0.0)
    norm = dinv_sqrt[src] * dinv_sqrt[dst]
    a = jnp.zeros((num_nodes, num_nodes), jnp.float32).at[dst, src].add(norm)
    return a


def xavier_uniform(key, shape):
    fan_out, fan_in = shape
    limit = (6.0 / (fan_in + fan_out)) ** 0.5
    return jax.random.uniform(key, shape, jnp.float32, -limit, limit)


# ----------------------------------------------------------------------------
# Demo
# ----------------------------------------------------------------------------
if __name__ == "__main__":
    num_users = 130
    num_items = 190
    embedding_dim = 64              # module default; padded to 128 lanes in-kernel
    num_layers = 3
    num_nodes = num_users + num_items     # 320 -> padded to 512, grid (3, 2, 2)

    # Deterministic synthetic bipartite interaction graph: each user <-> 5 items.
    fwd_src, fwd_dst = [], []
    for u in range(num_users):
        for j in range(5):
            it = num_users + (u * 7 + j * 13) % num_items
            fwd_src.append(u)
            fwd_dst.append(it)
    src = jnp.array(fwd_src + fwd_dst, dtype=jnp.int32)   # symmetric edges
    dst = jnp.array(fwd_dst + fwd_src, dtype=jnp.int32)
    edge_index = jnp.stack([src, dst])

    key = jax.random.PRNGKey(0)
    E0 = xavier_uniform(key, (num_nodes, embedding_dim))

    A_hat = build_normalized_adjacency(edge_index, num_nodes)

    # Auto mode (A-resident fast path for this small graph).
    E0_out, E_res = lightgcn_forward(A_hat, E0, num_layers=num_layers)
    # Forced streamed mode (exercises the pipelined pre-tiled A path too).
    _, E_str = lightgcn_forward(A_hat, E0, num_layers=num_layers, a_resident=False)
    E0_out = jax.block_until_ready(E0_out)
    E_res = jax.block_until_ready(E_res)
    E_str = jax.block_until_ready(E_str)

    # Pure-JAX f32 reference of the forward semantics.
    x = E0
    layers = [E0]
    for _ in range(num_layers):
        x = A_hat @ x
        layers.append(x)
    E_ref = jnp.mean(jnp.stack(layers), axis=0)

    assert E_res.shape == (num_nodes, embedding_dim)
    assert E_str.shape == (num_nodes, embedding_dim)
    assert E0_out.shape == (num_nodes, embedding_dim)
    assert jnp.allclose(E0_out, E0)
    # bf16 A / bf16 x operands with f32 accumulation: loose tolerance vs f32 ref.
    assert jnp.allclose(E_res, E_ref, atol=2e-2, rtol=2e-2), \
        float(jnp.max(jnp.abs(E_res - E_ref)))
    assert jnp.allclose(E_str, E_ref, atol=2e-2, rtol=2e-2), \
        float(jnp.max(jnp.abs(E_str - E_ref)))

    print("KERNEL_OK")
</pallas_src>

<mosaic_0001>
module attributes {stable_mosaic.version = 11 : i64} {
  func.func @_lightgcn_kernel(%arg0: i32, %arg1: i32, %arg2: i32, %arg3: memref<4x256x256xbf16, #tpu.memory_space<vmem>>, %arg4: memref<512x128xf32, #tpu.memory_space<any>>, %arg5: memref<256x128xf32, #tpu.memory_space<vmem>>, %arg6: memref<2x512x128xbf16, #tpu.memory_space<vmem>>, %arg7: memref<512x128xf32, #tpu.memory_space<vmem>>, %arg8: memref<256x128xf32, #tpu.memory_space<vmem>>) attributes {dimension_semantics = [#tpu.dimension_semantics<arbitrary>, #tpu.dimension_semantics<arbitrary>, #tpu.dimension_semantics<arbitrary>], iteration_bounds = array<i64: 3, 2, 2>, scalar_prefetch = 0 : i64, scratch_operands = 3 : i64, tpu.core_type = #tpu.core_type<tc>, window_params = [{pipeline_mode = #tpu.pipeline_mode<synchronous>, transform_indices = @transform_0, window_bounds = array<i64: 4, 256, 256>}, {}, {transform_indices = @transform_2, window_bounds = array<i64: 256, 128>}]} {
    %c1_i32 = arith.constant 1 : i32
    %0 = arith.cmpi eq, %arg2, %c1_i32 : i32
    %c256_i32 = arith.constant 256 : i32
    %1 = arith.muli %arg1, %c256_i32 : i32
    %2 = tpu.assume_multiple %1, 256 : i32
    %c256_i32_0 = arith.constant 256 : i32
    %3 = arith.muli %arg2, %c256_i32_0 : i32
    %4 = tpu.assume_multiple %3, 256 : i32
    %c2_i32 = arith.constant 2 : i32
    %c0_i32 = arith.constant 0 : i32
    %5 = arith.cmpi eq, %c2_i32, %c0_i32 : i32
    %c1_i32_1 = arith.constant 1 : i32
    %6 = arith.select %5, %c1_i32_1, %c2_i32 : i32
    %7 = arith.remsi %arg0, %6 : i32
    %c0_i32_2 = arith.constant 0 : i32
    %8 = arith.cmpi ne, %7, %c0_i32_2 : i32
    %c0_i32_3 = arith.constant 0 : i32
    %9 = arith.cmpi slt, %7, %c0_i32_3 : i32
    %c0_i32_4 = arith.constant 0 : i32
    %10 = arith.cmpi slt, %6, %c0_i32_4 : i32
    %11 = arith.xori %9, %10 : i1
    %12 = arith.andi %11, %8 : i1
    %13 = arith.addi %7, %6 : i32
    %14 = arith.select %12, %13, %7 : i32
    %c1_i32_5 = arith.constant 1 : i32
    %15 = arith.addi %arg0, %c1_i32_5 : i32
    %c2_i32_6 = arith.constant 2 : i32
    %c0_i32_7 = arith.constant 0 : i32
    %16 = arith.cmpi eq, %c2_i32_6, %c0_i32_7 : i32
    %c1_i32_8 = arith.constant 1 : i32
    %17 = arith.select %16, %c1_i32_8, %c2_i32_6 : i32
    %18 = arith.remsi %15, %17 : i32
    %c0_i32_9 = arith.constant 0 : i32
    %19 = arith.cmpi ne, %18, %c0_i32_9 : i32
    %c0_i32_10 = arith.constant 0 : i32
    %20 = arith.cmpi slt, %18, %c0_i32_10 : i32
    %c0_i32_11 = arith.constant 0 : i32
    %21 = arith.cmpi slt, %17, %c0_i32_11 : i32
    %22 = arith.xori %20, %21 : i1
    %23 = arith.andi %22, %19 : i1
    %24 = arith.addi %18, %17 : i32
    %25 = arith.select %23, %24, %18 : i32
    %c0_i32_12 = arith.constant 0 : i32
    %26 = arith.cmpi eq, %arg0, %c0_i32_12 : i32
    %c0_i32_13 = arith.constant 0 : i32
    %27 = arith.cmpi eq, %arg1, %c0_i32_13 : i32
    %c0_i32_14 = arith.constant 0 : i32
    %28 = arith.cmpi eq, %arg2, %c0_i32_14 : i32
    %29 = arith.andi %27, %28 : i1
    %30 = arith.andi %26, %29 : i1
    %31 = arith.extui %30 : i1 to i32
    %c0_i32_15 = arith.constant 0 : i32
    %32 = arith.cmpi ne, %31, %c0_i32_15 : i32
    scf.if %32 {
      "tpu.region"() ({
        %64 = tpu.sem_alloc : memref<!tpu.dma_semaphore, #tpu.memory_space<semaphore_mem>>
        tpu.enqueue_dma source(%arg4 : memref<512x128xf32, #tpu.memory_space<any>>) target(%arg7 : memref<512x128xf32, #tpu.memory_space<vmem>>) target_semaphore(%64 : memref<!tpu.dma_semaphore, #tpu.memory_space<semaphore_mem>>)
        tpu.wait_dma2 semaphore(%64 : memref<!tpu.dma_semaphore, #tpu.memory_space<semaphore_mem>>) src(%arg4 : memref<512x128xf32, #tpu.memory_space<any>>) dst(%arg7 : memref<512x128xf32, #tpu.memory_space<vmem>>)
        tpu.yield
      }) : () -> ()
      %c0_28 = arith.constant 0 : index
      %c0_29 = arith.constant 0 : index
      %59 = vector.load %arg7[%c0_28, %c0_29] : memref<512x128xf32, #tpu.memory_space<vmem>>, vector<512x128xf32>
      %60 = arith.truncf %59 : vector<512x128xf32> to vector<512x128xbf16>
      %c0_30 = arith.constant 0 : index
      %c0_31 = arith.constant 0 : index
      %c0_32 = arith.constant 0 : index
      %61 = vector.load %arg6[%c0_30, %c0_31, %c0_32] : memref<2x512x128xbf16, #tpu.memory_space<vmem>>, vector<1x512x128xbf16>
      %62 = vector.shape_cast %61 : vector<1x512x128xbf16> to vector<512x128xbf16>
      %63 = vector.shape_cast %60 : vector<512x128xbf16> to vector<1x512x128xbf16>
      tpu.vector_store %arg6[%c0_30, %c0_31, %c0_32], %63 {strides = array<i32>} : memref<2x512x128xbf16, #tpu.memory_space<vmem>>, vector<1x512x128xbf16>,
    } else {
    }
    %c2_i32_16 = arith.constant 2 : i32
    %33 = arith.muli %arg1, %c2_i32_16 : i32
    %34 = arith.addi %33, %arg2 : i32
    %35 = arith.index_cast %34 : i32 to index
    %c0 = arith.constant 0 : index
    %c0_17 = arith.constant 0 : index
    %36 = vector.load %arg3[%35, %c0, %c0_17] : memref<4x256x256xbf16, #tpu.memory_space<vmem>>, vector<1x256x256xbf16>
    %37 = vector.shape_cast %36 : vector<1x256x256xbf16> to vector<256x256xbf16>
    %38 = arith.index_cast %14 : i32 to index
    %39 = arith.index_cast %4 : i32 to index
    %c0_18 = arith.constant 0 : index
    %40 = vector.load %arg6[%38, %39, %c0_18] : memref<2x512x128xbf16, #tpu.memory_space<vmem>>, vector<1x256x128xbf16>
    %41 = vector.shape_cast %40 : vector<1x256x128xbf16> to vector<256x128xbf16>
    %cst = arith.constant dense<0.000000e+00> : vector<256x128xf32>
    %42 = tpu.matmul %37, %41, %cst {dimension_numbers = #tpu.dot_dimension_numbers<[1], [0], [0], [1], [0, 0, 1, 1], [], []>} : vector<256x256xbf16>, vector<256x128xbf16>, vector<256x128xf32> -> vector<256x128xf32>
    %c0_i32_19 = arith.constant 0 : i32
    %43 = arith.cmpi eq, %arg2, %c0_i32_19 : i32
    %44 = arith.extui %43 : i1 to i32
    %c0_i32_20 = arith.constant 0 : i32
    %45 = arith.cmpi ne, %44, %c0_i32_20 : i32
    scf.if %45 {
      %c0_28 = arith.constant 0 : index
      %c0_29 = arith.constant 0 : index
      %59 = vector.load %arg8[%c0_28, %c0_29] : memref<256x128xf32, #tpu.memory_space<vmem>>, vector<256x128xf32>
      tpu.vector_store %arg8[%c0_28, %c0_29], %42 {strides = array<i32>} : memref<256x128xf32, #tpu.memory_space<vmem>>, vector<256x128xf32>,
    } else {
    }
    %c0_i32_21 = arith.constant 0 : i32
    %46 = arith.cmpi sgt, %arg2, %c0_i32_21 : i32
    %47 = arith.extui %46 : i1 to i32
    %c0_i32_22 = arith.constant 0 : i32
    %48 = arith.cmpi ne, %47, %c0_i32_22 : i32
    scf.if %48 {
      %c0_28 = arith.constant 0 : index
      %c0_29 = arith.constant 0 : index
      %59 = vector.load %arg8[%c0_28, %c0_29] : memref<256x128xf32, #tpu.memory_space<vmem>>, vector<256x128xf32>
      %60 = arith.addf %59, %42 : vector<256x128xf32>
      %c0_30 = arith.constant 0 : index
      %c0_31 = arith.constant 0 : index
      %61 = vector.load %arg8[%c0_30, %c0_31] : memref<256x128xf32, #tpu.memory_space<vmem>>, vector<256x128xf32>
      tpu.vector_store %arg8[%c0_30, %c0_31], %60 {strides = array<i32>} : memref<256x128xf32, #tpu.memory_space<vmem>>, vector<256x128xf32>,
    } else {
    }
    %49 = arith.extui %0 : i1 to i32
    %c0_i32_23 = arith.constant 0 : i32
    %50 = arith.cmpi ne, %49, %c0_i32_23 : i32
    scf.if %50 {
      %59 = arith.index_cast %2 : i32 to index
      %c0_28 = arith.constant 0 : index
      %60 = vector.load %arg7[%59, %c0_28] : memref<512x128xf32, #tpu.memory_space<vmem>>, vector<256x128xf32>
      %c0_29 = arith.constant 0 : index
      %c0_30 = arith.constant 0 : index
      %61 = vector.load %arg8[%c0_29, %c0_30] : memref<256x128xf32, #tpu.memory_space<vmem>>, vector<256x128xf32>
      %62 = arith.addf %60, %61 : vector<256x128xf32>
      %63 = arith.index_cast %2 : i32 to index
      %c0_31 = arith.constant 0 : index
      %64 = vector.load %arg7[%63, %c0_31] : memref<512x128xf32, #tpu.memory_space<vmem>>, vector<256x128xf32>
      tpu.vector_store %arg7[%63, %c0_31], %62 {strides = array<i32>} : memref<512x128xf32, #tpu.memory_space<vmem>>, vector<256x128xf32>,
    } else {
    }
    %c2_i32_24 = arith.constant 2 : i32
    %51 = arith.cmpi slt, %arg0, %c2_i32_24 : i32
    %52 = arith.andi %0, %51 : i1
    %53 = arith.extui %52 : i1 to i32
    %c0_i32_25 = arith.constant 0 : i32
    %54 = arith.cmpi ne, %53, %c0_i32_25 : i32
    scf.if %54 {
      %c0_28 = arith.constant 0 : index
      %c0_29 = arith.constant 0 : index
      %59 = vector.load %arg8[%c0_28, %c0_29] : memref<256x128xf32, #tpu.memory_space<vmem>>, vector<256x128xf32>
      %60 = arith.truncf %59 : vector<256x128xf32> to vector<256x128xbf16>
      %61 = arith.index_cast %25 : i32 to index
      %62 = arith.index_cast %2 : i32 to index
      %c0_30 = arith.constant 0 : index
      %63 = vector.load %arg6[%61, %62, %c0_30] : memref<2x512x128xbf16, #tpu.memory_space<vmem>>, vector<1x256x128xbf16>
      %64 = vector.shape_cast %63 : vector<1x256x128xbf16> to vector<256x128xbf16>
      %65 = vector.shape_cast %60 : vector<256x128xbf16> to vector<1x256x128xbf16>
      tpu.vector_store %arg6[%61, %62, %c0_30], %65 {strides = array<i32>} : memref<2x512x128xbf16, #tpu.memory_space<vmem>>, vector<1x256x128xbf16>,
    } else {
    }
    %c2_i32_26 = arith.constant 2 : i32
    %55 = arith.cmpi eq, %arg0, %c2_i32_26 : i32
    %56 = arith.andi %0, %55 : i1
    %57 = arith.extui %56 : i1 to i32
    %c0_i32_27 = arith.constant 0 : i32
    %58 = arith.cmpi ne, %57, %c0_i32_27 : i32
    scf.if %58 {
      %59 = arith.index_cast %2 : i32 to index
      %c0_28 = arith.constant 0 : index
      %60 = vector.load %arg7[%59, %c0_28] : memref<512x128xf32, #tpu.memory_space<vmem>>, vector<256x128xf32>
      %cst_29 = arith.constant 2.500000e-01 : f32
      %61 = vector.broadcast %cst_29 : f32 to vector<256x128xf32>
      %62 = arith.mulf %60, %61 : vector<256x128xf32>
      %c0_30 = arith.constant 0 : index
      %c0_31 = arith.constant 0 : index
      %63 = vector.load %arg5[%c0_30, %c0_31] : memref<256x128xf32, #tpu.memory_space<vmem>>, vector<256x128xf32>
      tpu.vector_store %arg5[%c0_30, %c0_31], %62 {strides = array<i32>} : memref<256x128xf32, #tpu.memory_space<vmem>>, vector<256x128xf32>,
    } else {
    }
    return
  }
  func.func @transform_0(%arg0: i32, %arg1: i32, %arg2: i32) -> (i32, i32, i32) {
    %c0_i32 = arith.constant 0 : i32
    %c0_i32_0 = arith.constant 0 : i32
    %c0_i32_1 = arith.constant 0 : i32
    %c0_i32_2 = arith.constant 0 : i32
    return %c0_i32, %c0_i32_0, %c0_i32_1 : i32, i32, i32
  }
  func.func @transform_2(%arg0: i32, %arg1: i32, %arg2: i32) -> (i32, i32) {
    %c0_i32 = arith.constant 0 : i32
    %c0_i32_0 = arith.constant 0 : i32
    return %arg1, %c0_i32 : i32, i32
  }
}

</mosaic_0001>

<llo_original>
// kernel: tpu_custom_call.1
$region0: #{tpu_custom_call.1}
  #allocation0 [shape = 'u32[]', space=smem, size = 0x4, offset = 0x4, fixed_abs, tag = 'smem constant byte address 0x4 - core index']
  #allocation1 [shape = 'u32[72,128]{1,0:T(1,128)}', space=vmem, size = 0x9000, scoped, tag = 'internal scratch']
  #allocation2 [shape = 'bf16[2,512,128]{2,1,0:T(8,128)(2,1)}', space=vmem, size = 0x40000, scoped, tag = 'scratch operand']
  #allocation3 [shape = 'f32[512,128]{1,0:T(8,128)}', space=vmem, size = 0x40000, scoped, tag = 'scratch operand']
  #allocation4 [shape = 'f32[256,128]{1,0:T(8,128)}', space=vmem, size = 0x20000, scoped, tag = 'scratch operand']
  #allocation10 [shape = 's32[]', space=sflag, size = 0x4, offset = 0, fixed_abs, tag = 'sflag constant byte address 0x0 - dummy sync flag']
  #allocation11 [shape = 's32[]', space=sflag, size = 0x4, offset = 0, fixed_abs, tag = 'sflag constant byte address 0x0 - dummy sync flag']
  #allocation12 [shape = 'u32[]', space=smem, size = 0x4, offset = 0x44, fixed_abs, tag = 'smem constant byte address 0x44 - assertion arg 0']
  #allocation13 [shape = 'u32[]', space=smem, size = 0x4, offset = 0x48, fixed_abs, tag = 'smem constant byte address 0x48 - assertion arg 1']
  %s0 = inlined_call_operand.hbm [shape: bf16[4,256,256], index: 0, kind: input, shape index: {}]
  %s1 = inlined_call_operand.hbm [shape: f32[512,128], index: 1, kind: input, shape index: {}]
  %s2 = inlined_call_operand.hbm [shape: f32[512,128], index: 2, kind: output, shape index: {}]
  %s3 = sld [smem:[#allocation0]]
  $region70: #{tpu_custom_call.1} parent=0
    _
  %s5 = ssub.s32 1, %s3
  %s6 = scalar_select 0, %s5, %s3
  $region1: #{tpu_custom_call.1} parent=0
    #allocation5 [shape = 'u8[524288]{0}', space=vmem, size = 0x80000, scoped, tag = 'input window, operand 0, single buffered']
    #allocation6 [shape = 's32[2]{0}', space=sflag, size = 0x8, scoped, tag = 'scoped memory for tpu_custom_call.1']
    #allocation7 [shape = 's32[2]{0}', space=sflag, size = 0x8, scoped, tag = 'scoped memory for tpu_custom_call.1']
    #allocation8 [shape = 'u8[262144]{0}', space=vmem, size = 0x40000, scoped, tag = 'output window, operand 0']
    %7 = vsyncpa [#allocation6], 0
    %8 = vsyncpa [#allocation7], 0
    %s9 = scalar_lea.sflag [#allocation7], 1
    %10 = vsyncpa %s9, 0
    loop: start=0, step=1, limit=14
    $region2: #{tpu_custom_call.1} parent=1 // loop_pre_header
      _
    $region3: #{tpu_custom_call.1} parent=1 // loop_header
      %s12 = sphi 0, %s16
      %p13 = scmp.ge.s32.totalorder %s12, 14
      %s19 = sphi 0, %s38
      %s20 = sphi 0, %s34
      %s21 = sphi 0, %s30
      %s22 = sphi 0, %s19
      %s23 = sphi 0, %s20
      %s24 = sphi 0, %s21
      %s25 = sphi 0, %s22
      %s26 = sphi 0, %s23
      %s27 = sphi 0, %s24
      %s39 = sphi 0, %s39
      %s41 = sphi 0, %s39
      %s42 = sphi 0, %s41
      %s56 = sphi 0, %s42
      %s62 = sphi 0, %s64
      %s65 = sphi 0, %s62
      %s66 = sphi 0, %s65
      %s82 = sphi 0, %s66
    $region4: #{tpu_custom_call.1} parent=1 // loop_header_branch
      %15 = sbr.rel (%p13) target = $region8
    $region5: #{tpu_custom_call.1} parent=1 // loop_body
      %s17 = ssub.s32 %s12, 1
      %s18 = ssub.s32 %s12, 2
      %s28 = sadd.s32 1, %s21
      %p29 = scmp.ge.s32.totalorder %s28, 2
      %s30 = scalar_select %p29, 0, %s28
      %s31 = sadd.s32 1, %s20
      %s32 = scalar_select %p29, %s31, %s20
      %p33 = scmp.ge.s32.totalorder %s32, 2
      %s34 = scalar_select %p33, 0, %s32
      %s35 = sadd.s32 1, %s19
      %s36 = scalar_select %p33, %s35, %s19
      %p37 = scmp.ge.s32.totalorder %s36, 3
      %s38 = scalar_select %p37, 0, %s36
      %s40 = sadd.s32 %s39, 1
      %p43 = scmp.eq.s32.totalorder %s12, 11
      %p44 = scmp.ne.s32.totalorder %s39, %s41
      %p45 = scmp.eq.s32.totalorder %s12, 0
      %p46 = por %p44, %p45
      %p47 = scmp.ne.s32.totalorder %s39, %s41
      %p48 = scmp.eq.s32.totalorder %s17, 11
      %p49 = por %p47, %p48
      %p50 = scmp.ne.s32.totalorder %s41, %s42
      %p51 = scmp.eq.s32.totalorder %s17, 0
      %p52 = por %p50, %p51
      %p53 = scmp.ne.s32.totalorder %s41, %s42
      %p54 = scmp.eq.s32.totalorder %s18, 11
      %p55 = por %p53, %p54
      %p57 = scmp.ne.s32.totalorder %s42, %s56
      %p58 = scmp.eq.s32.totalorder %s18, 0
      %p59 = por %p57, %p58
      %s60 = ssub.s32 %s20, %s34
      %p61 = scmp.eq.s32.totalorder %s60, 0
      %s63 = sadd.s32 %s62, 1
      %s64 = scalar_select %p61, %s62, %s63
      %p67 = pneg %p61
      %p68 = scmp.eq.s32.totalorder %s12, 11
      %p69 = por %p67, %p68
      %p70 = scmp.ne.s32.totalorder %s62, %s65
      %p71 = scmp.eq.s32.totalorder %s12, 0
      %p72 = por %p70, %p71
      %p73 = scmp.ne.s32.totalorder %s62, %s65
      %p74 = scmp.eq.s32.totalorder %s17, 11
      %p75 = por %p73, %p74
      %p76 = scmp.ne.s32.totalorder %s65, %s66
      %p77 = scmp.eq.s32.totalorder %s17, 0
      %p78 = por %p76, %p77
      %p79 = scmp.ne.s32.totalorder %s65, %s66
      %p80 = scmp.eq.s32.totalorder %s18, 11
      %p81 = por %p79, %p80
      %p83 = scmp.ne.s32.totalorder %s66, %s82
      %p84 = scmp.eq.s32.totalorder %s18, 0
      %p85 = por %p83, %p84
      %p86 = scmp.le.s32.totalorder 1, %s12
      %p87 = scmp.lt.s32.totalorder %s12, 13
      %p88 = pnand %p86, %p87
      %p89 = pneg %p88
      // Predicated region
      $region9: #{tpu_custom_call.1} parent=5 // pred_check
        _
      $region10: #{tpu_custom_call.1} parent=5 // pred_check_branch
        %91 = sbr.rel (%p88) target = $region12
      $region11: #{tpu_custom_call.1} parent=5 // pred_region
        %s92 = ssub.s32 %s12, 1
        // Predicated region
        $region13: #{tpu_custom_call.1} parent=11 // pred_check
          %p93 = pneg %p52
        $region14: #{tpu_custom_call.1} parent=11 // pred_check_branch
          %95 = sbr.rel (%p93) target = $region16
        $region15: #{tpu_custom_call.1} parent=11 // pred_region
          %97 = vsyncadd [#allocation6], 0
          %s98 = sshll.u32 %s0, 4
          %s99 = int_to_ptr.hbm [resolvable:$true] %s98
          %s100 = sshll.u32 [#allocation5], 4
          %s101 = int_to_ptr.vmem [resolvable:$true] %s100
          %106 = dma.hbm_to_vmem [thread:$0]  %s99, 16384, %s101, [#allocation6], 128, 128, 8
        $region16: #{tpu_custom_call.1} parent=11 // pred_fallthru
          _
      $region12: #{tpu_custom_call.1} parent=5 // pred_fallthru
        _
      %p107 = scmp.lt.s32.totalorder %s12, 12
      // Predicated region
      $region17: #{tpu_custom_call.1} parent=5 // pred_check
        %p108 = pneg %p107
      $region18: #{tpu_custom_call.1} parent=5 // pred_check_branch
        %110 = sbr.rel (%p108) target = $region20
      $region19: #{tpu_custom_call.1} parent=5 // pred_region
        _
      $region20: #{tpu_custom_call.1} parent=5 // pred_fallthru
        _
      %p111 = scmp.le.s32.totalorder 1, %s12
      %p112 = scmp.lt.s32.totalorder %s12, 13
      %p113 = pnand %p111, %p112
      %p114 = pneg %p113
      // Predicated region
      $region21: #{tpu_custom_call.1} parent=5 // pred_check
        _
      $region22: #{tpu_custom_call.1} parent=5 // pred_check_branch
        %116 = sbr.rel (%p113) target = $region24
      $region23: #{tpu_custom_call.1} parent=5 // pred_region
        %s117 = ssub.s32 %s12, 1
        // Predicated region
        $region25: #{tpu_custom_call.1} parent=23 // pred_check
          %p118 = pneg %p52
        $region26: #{tpu_custom_call.1} parent=23 // pred_check_branch
          %120 = sbr.rel (%p118) target = $region28
        $region27: #{tpu_custom_call.1} parent=23 // pred_region
          %122 = dma.done [#allocation6], 16384
        $region28: #{tpu_custom_call.1} parent=23 // pred_fallthru
          _
        %p123 = pneg %p52
        %p124 = pneg %p49
        %p125 = pneg %p78
        %p126 = pneg %p75
        %s127 = sand.u32 %s65, 1
        %s128 = scalar_lea.sflag [#allocation7], %s127
        %s129 = sand.u32 %s65, 1
        %s130 = smul.addr %s129, 256
        %s131 = scalar_lea.vmem [#allocation8], %s130
        %s132 = smul.u32 32, %s23
        %p133 = scmp.eq.s32.totalorder %s24, 1
        %s134 = smul.u32 %s23, 256
        %s135 = smul.u32 %s24, 256
        %p136 = scmp.lt.s32.totalorder %s22, 0
        %s137 = ssub.s32 0, %s22
        %s138 = scalar_select %p136, %s137, %s22
        %s139 = sand.u32 %s138, 1
        %s140 = ssub.s32 0, %s139
        %s141 = scalar_select %p136, %s140, %s139
        %p142 = scmp.ne.s32.totalorder %s141, 0
        %p143 = scmp.lt.s32.totalorder %s141, 0
        %p144 = pnand %p143, %p142
        %p145 = pneg %p144
        %s146 = sadd.s32 %s141, 2
        %s147 = scalar_select %p145, %s146, %s141
        %s148 = sadd.s32 %s22, 1
        %p149 = scmp.lt.s32.totalorder %s148, 0
        %s150 = ssub.s32 0, %s148
        %s151 = scalar_select %p149, %s150, %s148
        %s152 = sand.u32 %s151, 1
        %s153 = ssub.s32 0, %s152
        %s154 = scalar_select %p149, %s153, %s152
        %p155 = scmp.ne.s32.totalorder %s154, 0
        %p156 = scmp.lt.s32.totalorder %s154, 0
        %p157 = pnand %p156, %p155
        %p158 = pneg %p157
        %s159 = sadd.s32 %s154, 2
        %s160 = scalar_select %p158, %s159, %s154
        %p161 = scmp.eq.s32.totalorder %s22, 0
        %p162 = scmp.eq.s32.totalorder %s23, 0
        %p163 = scmp.eq.s32.totalorder %s24, 0
        %p164 = pnand %p162, %p163
        %p165 = pneg %p164
        %p166 = pnand %p161, %p165
        %p167 = pneg %p166
        // Predicated region
        $region29: #{tpu_custom_call.1} parent=23 // pred_check
          _
        $region30: #{tpu_custom_call.1} parent=23 // pred_check_branch
          %169 = sbr.rel (%p166) target = $region32
        $region31: #{tpu_custom_call.1} parent=23 // pred_region
          $region33: #{tpu_custom_call.1} parent=31
            #allocation9 [shape = 's32[1]{0}', space=sflag, size = 0x4, scoped, tag = 'scoped memory for tpu_custom_call.1']
            // Predicated region
            $region34: #{tpu_custom_call.1} parent=33 // pred_check
              _
            $region35: #{tpu_custom_call.1} parent=33 // pred_check_branch
              %171 = sbr.rel target = $region37
            $region36: #{tpu_custom_call.1} parent=33 // pred_region
              %172 = sst [smem:[#allocation12]] [#allocation11]
              %173 = sst [smem:[#allocation13]] [#allocation10]
            $region37: #{tpu_custom_call.1} parent=33 // pred_fallthru
              _
            %175 = shalt.err (0)
            %s177 = sshll.u32 %s1, 4
            %s178 = int_to_ptr.hbm [resolvable:$true] %s177
            %s179 = sshll.u32 [#allocation3], 4
            %s180 = int_to_ptr.vmem [resolvable:$true] %s179
            %182 = dma.hbm_to_vmem [thread:$0]  %s178, 8192, %s180, [#allocation9]
            %s183 = smul.u32 512, 1
            %s184 = sshll.u32 %s183, 4
            %185 = dma.done [#allocation9], %s184
          %v186 = vld [vmem:[#allocation3] sm:$0xff]
          %v187 = vld [vmem:[#allocation3 + $0x8] sm:$0xff]
          %v188 = vld [vmem:[#allocation3 + $0x10] sm:$0xff]
          %v189 = vld [vmem:[#allocation3 + $0x18] sm:$0xff]
          %v190 = vld [vmem:[#allocation3 + $0x20] sm:$0xff]
          %v191 = vld [vmem:[#allocation3 + $0x28] sm:$0xff]
          %v192 = vld [vmem:[#allocation3 + $0x30] sm:$0xff]
          %v193 = vld [vmem:[#allocation3 + $0x38] sm:$0xff]
          %v194 = vld [vmem:[#allocation3 + $0x40] sm:$0xff]
          %v195 = vld [vmem:[#allocation3 + $0x48] sm:$0xff]
          %v196 = vld [vmem:[#allocation3 + $0x50] sm:$0xff]
          %v197 = vld [vmem:[#allocation3 + $0x58] sm:$0xff]
          %v198 = vld [vmem:[#allocation3 + $0x60] sm:$0xff]
          %v199 = vld [vmem:[#allocation3 + $0x68] sm:$0xff]
          %v200 = vld [vmem:[#allocation3 + $0x70] sm:$0xff]
          %v201 = vld [vmem:[#allocation3 + $0x78] sm:$0xff]
          %v202 = vld [vmem:[#allocation3 + $0x80] sm:$0xff]
          %v203 = vld [vmem:[#allocation3 + $0x88] sm:$0xff]
          %v204 = vld [vmem:[#allocation3 + $0x90] sm:$0xff]
          %v205 = vld [vmem:[#allocation3 + $0x98] sm:$0xff]
          %v206 = vld [vmem:[#allocation3 + $0xa0] sm:$0xff]
          %v207 = vld [vmem:[#allocation3 + $0xa8] sm:$0xff]
          %v208 = vld [vmem:[#allocation3 + $0xb0] sm:$0xff]
          %v209 = vld [vmem:[#allocation3 + $0xb8] sm:$0xff]
          %v210 = vld [vmem:[#allocation3 + $0xc0] sm:$0xff]
          %v211 = vld [vmem:[#allocation3 + $0xc8] sm:$0xff]
          %v212 = vld [vmem:[#allocation3 + $0xd0] sm:$0xff]
          %v213 = vld [vmem:[#allocation3 + $0xd8] sm:$0xff]
          %v214 = vld [vmem:[#allocation3 + $0xe0] sm:$0xff]
          %v215 = vld [vmem:[#allocation3 + $0xe8] sm:$0xff]
          %v216 = vld [vmem:[#allocation3 + $0xf0] sm:$0xff]
          %v217 = vld [vmem:[#allocation3 + $0xf8] sm:$0xff]
          %v218 = vld [vmem:[#allocation3 + $0x100] sm:$0xff]
          %v219 = vld [vmem:[#allocation3 + $0x108] sm:$0xff]
          %v220 = vld [vmem:[#allocation3 + $0x110] sm:$0xff]
          %v221 = vld [vmem:[#allocation3 + $0x118] sm:$0xff]
          %v222 = vld [vmem:[#allocation3 + $0x120] sm:$0xff]
          %v223 = vld [vmem:[#allocation3 + $0x128] sm:$0xff]
          %v224 = vld [vmem:[#allocation3 + $0x130] sm:$0xff]
          %v225 = vld [vmem:[#allocation3 + $0x138] sm:$0xff]
          %v226 = vld [vmem:[#allocation3 + $0x140] sm:$0xff]
          %v227 = vld [vmem:[#allocation3 + $0x148] sm:$0xff]
          %v228 = vld [vmem:[#allocation3 + $0x150] sm:$0xff]
          %v229 = vld [vmem:[#allocation3 + $0x158] sm:$0xff]
          %v230 = vld [vmem:[#allocation3 + $0x160] sm:$0xff]
          %v231 = vld [vmem:[#allocation3 + $0x168] sm:$0xff]
          %v232 = vld [vmem:[#allocation3 + $0x170] sm:$0xff]
          %v233 = vld [vmem:[#allocation3 + $0x178] sm:$0xff]
          %v234 = vld [vmem:[#allocation3 + $0x180] sm:$0xff]
          %v235 = vld [vmem:[#allocation3 + $0x188] sm:$0xff]
          %v236 = vld [vmem:[#allocation3 + $0x190] sm:$0xff]
          %v237 = vld [vmem:[#allocation3 + $0x198] sm:$0xff]
          %v238 = vld [vmem:[#allocation3 + $0x1a0] sm:$0xff]
          %v239 = vld [vmem:[#allocation3 + $0x1a8] sm:$0xff]
          %v240 = vld [vmem:[#allocation3 + $0x1b0] sm:$0xff]
          %v241 = vld [vmem:[#allocation3 + $0x1b8] sm:$0xff]
          %v242 = vld [vmem:[#allocation3 + $0x1c0] sm:$0xff]
          %v243 = vld [vmem:[#allocation3 + $0x1c8] sm:$0xff]
          %v244 = vld [vmem:[#allocation3 + $0x1d0] sm:$0xff]
          %v245 = vld [vmem:[#allocation3 + $0x1d8] sm:$0xff]
          %v246 = vld [vmem:[#allocation3 + $0x1e0] sm:$0xff]
          %v247 = vld [vmem:[#allocation3 + $0x1e8] sm:$0xff]
          %v248 = vld [vmem:[#allocation3 + $0x1f0] sm:$0xff]
          %v249 = vld [vmem:[#allocation3 + $0x1f8] sm:$0xff]
          %v250 = vpack.c.bf16 %v186, %v186
          %v251 = vpack.c.bf16 %v187, %v187
          %v252 = vpack.c.bf16 %v188, %v188
          %v253 = vpack.c.bf16 %v189, %v189
          %v254 = vpack.c.bf16 %v190, %v190
          %v255 = vpack.c.bf16 %v191, %v191
          %v256 = vpack.c.bf16 %v192, %v192
          %v257 = vpack.c.bf16 %v193, %v193
          %v258 = vpack.c.bf16 %v194, %v194
          %v259 = vpack.c.bf16 %v195, %v195
          %v260 = vpack.c.bf16 %v196, %v196
          %v261 = vpack.c.bf16 %v197, %v197
          %v262 = vpack.c.bf16 %v198, %v198
          %v263 = vpack.c.bf16 %v199, %v199
          %v264 = vpack.c.bf16 %v200, %v200
          %v265 = vpack.c.bf16 %v201, %v201
          %v266 = vpack.c.bf16 %v202, %v202
          %v267 = vpack.c.bf16 %v203, %v203
          %v268 = vpack.c.bf16 %v204, %v204
          %v269 = vpack.c.bf16 %v205, %v205
          %v270 = vpack.c.bf16 %v206, %v206
          %v271 = vpack.c.bf16 %v207, %v207
          %v272 = vpack.c.bf16 %v208, %v208
          %v273 = vpack.c.bf16 %v209, %v209
          %v274 = vpack.c.bf16 %v210, %v210
          %v275 = vpack.c.bf16 %v211, %v211
          %v276 = vpack.c.bf16 %v212, %v212
          %v277 = vpack.c.bf16 %v213, %v213
          %v278 = vpack.c.bf16 %v214, %v214
          %v279 = vpack.c.bf16 %v215, %v215
          %v280 = vpack.c.bf16 %v216, %v216
          %v281 = vpack.c.bf16 %v217, %v217
          %v282 = vpack.c.bf16 %v218, %v218
          %v283 = vpack.c.bf16 %v219, %v219
          %v284 = vpack.c.bf16 %v220, %v220
          %v285 = vpack.c.bf16 %v221, %v221
          %v286 = vpack.c.bf16 %v222, %v222
          %v287 = vpack.c.bf16 %v223, %v223
          %v288 = vpack.c.bf16 %v224, %v224
          %v289 = vpack.c.bf16 %v225, %v225
          %v290 = vpack.c.bf16 %v226, %v226
          %v291 = vpack.c.bf16 %v227, %v227
          %v292 = vpack.c.bf16 %v228, %v228
          %v293 = vpack.c.bf16 %v229, %v229
          %v294 = vpack.c.bf16 %v230, %v230
          %v295 = vpack.c.bf16 %v231, %v231
          %v296 = vpack.c.bf16 %v232, %v232
          %v297 = vpack.c.bf16 %v233, %v233
          %v298 = vpack.c.bf16 %v234, %v234
          %v299 = vpack.c.bf16 %v235, %v235
          %v300 = vpack.c.bf16 %v236, %v236
          %v301 = vpack.c.bf16 %v237, %v237
          %v302 = vpack.c.bf16 %v238, %v238
          %v303 = vpack.c.bf16 %v239, %v239
          %v304 = vpack.c.bf16 %v240, %v240
          %v305 = vpack.c.bf16 %v241, %v241
          %v306 = vpack.c.bf16 %v242, %v242
          %v307 = vpack.c.bf16 %v243, %v243
          %v308 = vpack.c.bf16 %v244, %v244
          %v309 = vpack.c.bf16 %v245, %v245
          %v310 = vpack.c.bf16 %v246, %v246
          %v311 = vpack.c.bf16 %v247, %v247
          %v312 = vpack.c.bf16 %v248, %v248
          %v313 = vpack.c.bf16 %v249, %v249
          %314 = vst [vmem:[#allocation2] sm:$0xf] %v250
          %315 = vst [vmem:[#allocation2 + $0x4] sm:$0xf] %v251
          %316 = vst [vmem:[#allocation2 + $0x8] sm:$0xf] %v252
          %317 = vst [vmem:[#allocation2 + $0xc] sm:$0xf] %v253
          %318 = vst [vmem:[#allocation2 + $0x10] sm:$0xf] %v254
          %319 = vst [vmem:[#allocation2 + $0x14] sm:$0xf] %v255
          %320 = vst [vmem:[#allocation2 + $0x18] sm:$0xf] %v256
          %321 = vst [vmem:[#allocation2 + $0x1c] sm:$0xf] %v257
          %322 = vst [vmem:[#allocation2 + $0x20] sm:$0xf] %v258
          %323 = vst [vmem:[#allocation2 + $0x24] sm:$0xf] %v259
          %324 = vst [vmem:[#allocation2 + $0x28] sm:$0xf] %v260
          %325 = vst [vmem:[#allocation2 + $0x2c] sm:$0xf] %v261
          %326 = vst [vmem:[#allocation2 + $0x30] sm:$0xf] %v262
          %327 = vst [vmem:[#allocation2 + $0x34] sm:$0xf] %v263
          %328 = vst [vmem:[#allocation2 + $0x38] sm:$0xf] %v264
          %329 = vst [vmem:[#allocation2 + $0x3c] sm:$0xf] %v265
          %330 = vst [vmem:[#allocation2 + $0x40] sm:$0xf] %v266
          %331 = vst [vmem:[#allocation2 + $0x44] sm:$0xf] %v267
          %332 = vst [vmem:[#allocation2 + $0x48] sm:$0xf] %v268
          %333 = vst [vmem:[#allocation2 + $0x4c] sm:$0xf] %v269
          %334 = vst [vmem:[#allocation2 + $0x50] sm:$0xf] %v270
          %335 = vst [vmem:[#allocation2 + $0x54] sm:$0xf] %v271
          %336 = vst [vmem:[#allocation2 + $0x58] sm:$0xf] %v272
          %337 = vst [vmem:[#allocation2 + $0x5c] sm:$0xf] %v273
          %338 = vst [vmem:[#allocation2 + $0x60] sm:$0xf] %v274
          %339 = vst [vmem:[#allocation2 + $0x64] sm:$0xf] %v275
          %340 = vst [vmem:[#allocation2 + $0x68] sm:$0xf] %v276
          %341 = vst [vmem:[#allocation2 + $0x6c] sm:$0xf] %v277
          %342 = vst [vmem:[#allocation2 + $0x70] sm:$0xf] %v278
          %343 = vst [vmem:[#allocation2 + $0x74] sm:$0xf] %v279
          %344 = vst [vmem:[#allocation2 + $0x78] sm:$0xf] %v280
          %345 = vst [vmem:[#allocation2 + $0x7c] sm:$0xf] %v281
          %346 = vst [vmem:[#allocation2 + $0x80] sm:$0xf] %v282
          %347 = vst [vmem:[#allocation2 + $0x84] sm:$0xf] %v283
          %348 = vst [vmem:[#allocation2 + $0x88] sm:$0xf] %v284
          %349 = vst [vmem:[#allocation2 + $0x8c] sm:$0xf] %v285
          %350 = vst [vmem:[#allocation2 + $0x90] sm:$0xf] %v286
          %351 = vst [vmem:[#allocation2 + $0x94] sm:$0xf] %v287
          %352 = vst [vmem:[#allocation2 + $0x98] sm:$0xf] %v288
          %353 = vst [vmem:[#allocation2 + $0x9c] sm:$0xf] %v289
          %354 = vst [vmem:[#allocation2 + $0xa0] sm:$0xf] %v290
          %355 = vst [vmem:[#allocation2 + $0xa4] sm:$0xf] %v291
          %356 = vst [vmem:[#allocation2 + $0xa8] sm:$0xf] %v292
          %357 = vst [vmem:[#allocation2 + $0xac] sm:$0xf] %v293
          %358 = vst [vmem:[#allocation2 + $0xb0] sm:$0xf] %v294
          %359 = vst [vmem:[#allocation2 + $0xb4] sm:$0xf] %v295
          %360 = vst [vmem:[#allocation2 + $0xb8] sm:$0xf] %v296
          %361 = vst [vmem:[#allocation2 + $0xbc] sm:$0xf] %v297
          %362 = vst [vmem:[#allocation2 + $0xc0] sm:$0xf] %v298
          %363 = vst [vmem:[#allocation2 + $0xc4] sm:$0xf] %v299
          %364 = vst [vmem:[#allocation2 + $0xc8] sm:$0xf] %v300
          %365 = vst [vmem:[#allocation2 + $0xcc] sm:$0xf] %v301
          %366 = vst [vmem:[#allocation2 + $0xd0] sm:$0xf] %v302
          %367 = vst [vmem:[#allocation2 + $0xd4] sm:$0xf] %v303
          %368 = vst [vmem:[#allocation2 + $0xd8] sm:$0xf] %v304
          %369 = vst [vmem:[#allocation2 + $0xdc] sm:$0xf] %v305
          %370 = vst [vmem:[#allocation2 + $0xe0] sm:$0xf] %v306
          %371 = vst [vmem:[#allocation2 + $0xe4] sm:$0xf] %v307
          %372 = vst [vmem:[#allocation2 + $0xe8] sm:$0xf] %v308
          %373 = vst [vmem:[#allocation2 + $0xec] sm:$0xf] %v309
          %374 = vst [vmem:[#allocation2 + $0xf0] sm:$0xf] %v310
          %375 = vst [vmem:[#allocation2 + $0xf4] sm:$0xf] %v311
          %376 = vst [vmem:[#allocation2 + $0xf8] sm:$0xf] %v312
          %377 = vst [vmem:[#allocation2 + $0xfc] sm:$0xf] %v313
        $region32: #{tpu_custom_call.1} parent=23 // pred_fallthru
          _
        %s378 = smul.u32 %s23, 2
        %s379 = sadd.s32 %s378, %s24
        %s380 = smul.u32 %s379, 64
        %s381 = smul.addr %s380, 4
        %s382 = scalar_lea.vmem [#allocation5], %s381
        %v383 = vld [vmem:[%s382] sm:$0xff]
        %v384 = vld [vmem:[%s382 + $0x8] sm:$0xff]
        %v385 = vld [vmem:[%s382 + $0x10] sm:$0xff]
        %v386 = vld [vmem:[%s382 + $0x18] sm:$0xff]
        %v387 = vld [vmem:[%s382 + $0x20] sm:$0xff]
        %v388 = vld [vmem:[%s382 + $0x28] sm:$0xff]
        %v389 = vld [vmem:[%s382 + $0x30] sm:$0xff]
        %v390 = vld [vmem:[%s382 + $0x38] sm:$0xff]
        %v391 = vld [vmem:[%s382 + $0x40] sm:$0xff]
        %v392 = vld [vmem:[%s382 + $0x48] sm:$0xff]
        %v393 = vld [vmem:[%s382 + $0x50] sm:$0xff]
        %v394 = vld [vmem:[%s382 + $0x58] sm:$0xff]
        %v395 = vld [vmem:[%s382 + $0x60] sm:$0xff]
        %v396 = vld [vmem:[%s382 + $0x68] sm:$0xff]
        %v397 = vld [vmem:[%s382 + $0x70] sm:$0xff]
        %v398 = vld [vmem:[%s382 + $0x78] sm:$0xff]
        %v399 = vld [vmem:[%s382 + $0x80] sm:$0xff]
        %v400 = vld [vmem:[%s382 + $0x88] sm:$0xff]
        %v401 = vld [vmem:[%s382 + $0x90] sm:$0xff]
        %v402 = vld [vmem:[%s382 + $0x98] sm:$0xff]
        %v403 = vld [vmem:[%s382 + $0xa0] sm:$0xff]
        %v404 = vld [vmem:[%s382 + $0xa8] sm:$0xff]
        %v405 = vld [vmem:[%s382 + $0xb0] sm:$0xff]
        %v406 = vld [vmem:[%s382 + $0xb8] sm:$0xff]
        %v407 = vld [vmem:[%s382 + $0xc0] sm:$0xff]
        %v408 = vld [vmem:[%s382 + $0xc8] sm:$0xff]
        %v409 = vld [vmem:[%s382 + $0xd0] sm:$0xff]
        %v410 = vld [vmem:[%s382 + $0xd8] sm:$0xff]
        %v411 = vld [vmem:[%s382 + $0xe0] sm:$0xff]
        %v412 = vld [vmem:[%s382 + $0xe8] sm:$0xff]
        %v413 = vld [vmem:[%s382 + $0xf0] sm:$0xff]
        %v414 = vld [vmem:[%s382 + $0xf8] sm:$0xff]
        %s415 = sshra.s32 %s135, 3
        %s416 = sand.u32 %s135, 7
        %s417 = smul.u32 %s147, 64
        %s418 = sadd.s32 %s415, %s417
        %s419 = smul.addr %s418, 4
        %s420 = scalar_lea.vmem [#allocation2], %s419
        %v421 = vld [vmem:[%s420] sm:$0xf]
        %v422 = vld [vmem:[%s420 + $0x4] sm:$0xf]
        %v423 = vld [vmem:[%s420 + $0x8] sm:$0xf]
        %v424 = vld [vmem:[%s420 + $0xc] sm:$0xf]
        %v425 = vld [vmem:[%s420 + $0x10] sm:$0xf]
        %v426 = vld [vmem:[%s420 + $0x14] sm:$0xf]
        %v427 = vld [vmem:[%s420 + $0x18] sm:$0xf]
        %v428 = vld [vmem:[%s420 + $0x1c] sm:$0xf]
        %v429 = vld [vmem:[%s420 + $0x20] sm:$0xf]
        %v430 = vld [vmem:[%s420 + $0x24] sm:$0xf]
        %v431 = vld [vmem:[%s420 + $0x28] sm:$0xf]
        %v432 = vld [vmem:[%s420 + $0x2c] sm:$0xf]
        %v433 = vld [vmem:[%s420 + $0x30] sm:$0xf]
        %v434 = vld [vmem:[%s420 + $0x34] sm:$0xf]
        %v435 = vld [vmem:[%s420 + $0x38] sm:$0xf]
        %v436 = vld [vmem:[%s420 + $0x3c] sm:$0xf]
        %v437 = vld [vmem:[%s420 + $0x40] sm:$0xf]
        %v438 = vld [vmem:[%s420 + $0x44] sm:$0xf]
        %v439 = vld [vmem:[%s420 + $0x48] sm:$0xf]
        %v440 = vld [vmem:[%s420 + $0x4c] sm:$0xf]
        %v441 = vld [vmem:[%s420 + $0x50] sm:$0xf]
        %v442 = vld [vmem:[%s420 + $0x54] sm:$0xf]
        %v443 = vld [vmem:[%s420 + $0x58] sm:$0xf]
        %v444 = vld [vmem:[%s420 + $0x5c] sm:$0xf]
        %v445 = vld [vmem:[%s420 + $0x60] sm:$0xf]
        %v446 = vld [vmem:[%s420 + $0x64] sm:$0xf]
        %v447 = vld [vmem:[%s420 + $0x68] sm:$0xf]
        %v448 = vld [vmem:[%s420 + $0x6c] sm:$0xf]
        %v449 = vld [vmem:[%s420 + $0x70] sm:$0xf]
        %v450 = vld [vmem:[%s420 + $0x74] sm:$0xf]
        %v451 = vld [vmem:[%s420 + $0x78] sm:$0xf]
        %v452 = vld [vmem:[%s420 + $0x7c] sm:$0xf]
        %v485 = vunpack.c.l.b16 %v383
        %v486 = vunpack.c.h.b16 %v383
        %v487 = vunpack.c.l.b16 %v384
        %v488 = vunpack.c.h.b16 %v384
        %v489 = vunpack.c.l.b16 %v385
        %v490 = vunpack.c.h.b16 %v385
        %v491 = vunpack.c.l.b16 %v386
        %v492 = vunpack.c.h.b16 %v386
        %v493 = vunpack.c.l.b16 %v387
        %v494 = vunpack.c.h.b16 %v387
        %v495 = vunpack.c.l.b16 %v388
        %v496 = vunpack.c.h.b16 %v388
        %v497 = vunpack.c.l.b16 %v389
        %v498 = vunpack.c.h.b16 %v389
        %v499 = vunpack.c.l.b16 %v390
        %v500 = vunpack.c.h.b16 %v390
        %v501 = vunpack.c.l.b16 %v391
        %v502 = vunpack.c.h.b16 %v391
        %v503 = vunpack.c.l.b16 %v392
        %v504 = vunpack.c.h.b16 %v392
        %v505 = vunpack.c.l.b16 %v393
        %v506 = vunpack.c.h.b16 %v393
        %v507 = vunpack.c.l.b16 %v394
        %v508 = vunpack.c.h.b16 %v394
        %v509 = vunpack.c.l.b16 %v395
        %v510 = vunpack.c.h.b16 %v395
        %v511 = vunpack.c.l.b16 %v396
        %v512 = vunpack.c.h.b16 %v396
        %v513 = vunpack.c.l.b16 %v397
        %v514 = vunpack.c.h.b16 %v397
        %v515 = vunpack.c.l.b16 %v398
        %v516 = vunpack.c.h.b16 %v398
        %v517 = vunpack.c.l.b16 %v399
        %v518 = vunpack.c.h.b16 %v399
        %v519 = vunpack.c.l.b16 %v400
        %v520 = vunpack.c.h.b16 %v400
        %v521 = vunpack.c.l.b16 %v401
        %v522 = vunpack.c.h.b16 %v401
        %v523 = vunpack.c.l.b16 %v402
        %v524 = vunpack.c.h.b16 %v402
        %v525 = vunpack.c.l.b16 %v403
        %v526 = vunpack.c.h.b16 %v403
        %v527 = vunpack.c.l.b16 %v404
        %v528 = vunpack.c.h.b16 %v404
        %v529 = vunpack.c.l.b16 %v405
        %v530 = vunpack.c.h.b16 %v405
        %v531 = vunpack.c.l.b16 %v406
        %v532 = vunpack.c.h.b16 %v406
        %v533 = vunpack.c.l.b16 %v407
        %v534 = vunpack.c.h.b16 %v407
        %v535 = vunpack.c.l.b16 %v408
        %v536 = vunpack.c.h.b16 %v408
        %v537 = vunpack.c.l.b16 %v409
        %v538 = vunpack.c.h.b16 %v409
        %v539 = vunpack.c.l.b16 %v410
        %v540 = vunpack.c.h.b16 %v410
        %v541 = vunpack.c.l.b16 %v411
        %v542 = vunpack.c.h.b16 %v411
        %v543 = vunpack.c.l.b16 %v412
        %v544 = vunpack.c.h.b16 %v412
        %v545 = vunpack.c.l.b16 %v413
        %v546 = vunpack.c.h.b16 %v413
        %v547 = vunpack.c.l.b16 %v414
        %v548 = vunpack.c.h.b16 %v414
        %v549 = vpack.c.b16 %v487, %v485
        %v550 = vpack.c.b16 %v488, %v486
        %v551 = vpack.c.b16 %v491, %v489
        %v552 = vpack.c.b16 %v492, %v490
        %v553 = vpack.c.b16 %v495, %v493
        %v554 = vpack.c.b16 %v496, %v494
        %v555 = vpack.c.b16 %v499, %v497
        %v556 = vpack.c.b16 %v500, %v498
        %v557 = vpack.c.b16 %v503, %v501
        %v558 = vpack.c.b16 %v504, %v502
        %v559 = vpack.c.b16 %v507, %v505
        %v560 = vpack.c.b16 %v508, %v506
        %v561 = vpack.c.b16 %v511, %v509
        %v562 = vpack.c.b16 %v512, %v510
        %v563 = vpack.c.b16 %v515, %v513
        %v564 = vpack.c.b16 %v516, %v514
        %v565 = vpack.c.b16 %v519, %v517
        %v566 = vpack.c.b16 %v520, %v518
        %v567 = vpack.c.b16 %v523, %v521
        %v568 = vpack.c.b16 %v524, %v522
        %v569 = vpack.c.b16 %v527, %v525
        %v570 = vpack.c.b16 %v528, %v526
        %v571 = vpack.c.b16 %v531, %v529
        %v572 = vpack.c.b16 %v532, %v530
        %v573 = vpack.c.b16 %v535, %v533
        %v574 = vpack.c.b16 %v536, %v534
        %v575 = vpack.c.b16 %v539, %v537
        %v576 = vpack.c.b16 %v540, %v538
        %v577 = vpack.c.b16 %v543, %v541
        %v578 = vpack.c.b16 %v544, %v542
        %v579 = vpack.c.b16 %v547, %v545
        %v580 = vpack.c.b16 %v548, %v546
        %v645 = vunpack.c.l.b16 %v421
        %v646 = vunpack.c.l.b16 %v422
        %v647 = vunpack.c.l.b16 %v423
        %v648 = vunpack.c.l.b16 %v424
        %v649 = vunpack.c.l.b16 %v425
        %v650 = vunpack.c.l.b16 %v426
        %v651 = vunpack.c.l.b16 %v427
        %v652 = vunpack.c.l.b16 %v428
        %v653 = vunpack.c.l.b16 %v429
        %v654 = vunpack.c.l.b16 %v430
        %v655 = vunpack.c.l.b16 %v431
        %v656 = vunpack.c.l.b16 %v432
        %v657 = vunpack.c.l.b16 %v433
        %v658 = vunpack.c.l.b16 %v434
        %v659 = vunpack.c.l.b16 %v435
        %v660 = vunpack.c.l.b16 %v436
        %v661 = vunpack.c.l.b16 %v437
        %v662 = vunpack.c.l.b16 %v438
        %v663 = vunpack.c.l.b16 %v439
        %v664 = vunpack.c.l.b16 %v440
        %v665 = vunpack.c.l.b16 %v441
        %v666 = vunpack.c.l.b16 %v442
        %v667 = vunpack.c.l.b16 %v443
        %v668 = vunpack.c.l.b16 %v444
        %v669 = vunpack.c.l.b16 %v445
        %v670 = vunpack.c.l.b16 %v446
        %v671 = vunpack.c.l.b16 %v447
        %v672 = vunpack.c.l.b16 %v448
        %v673 = vunpack.c.l.b16 %v449
        %v674 = vunpack.c.l.b16 %v450
        %v675 = vunpack.c.l.b16 %v451
        %v676 = vunpack.c.l.b16 %v452
        %v677 = vpack.c.b16 %v646, %v645
        %v678 = vpack.c.b16 %v648, %v647
        %v679 = vpack.c.b16 %v650, %v649
        %v680 = vpack.c.b16 %v652, %v651
        %v681 = vpack.c.b16 %v654, %v653
        %v682 = vpack.c.b16 %v656, %v655
        %v683 = vpack.c.b16 %v658, %v657
        %v684 = vpack.c.b16 %v660, %v659
        %v685 = vpack.c.b16 %v662, %v661
        %v686 = vpack.c.b16 %v664, %v663
        %v687 = vpack.c.b16 %v666, %v665
        %v688 = vpack.c.b16 %v668, %v667
        %v689 = vpack.c.b16 %v670, %v669
        %v690 = vpack.c.b16 %v672, %v671
        %v691 = vpack.c.b16 %v674, %v673
        %v692 = vpack.c.b16 %v676, %v675
        %709 = vmatpush.bf16.msra.mxu0 %v684
        %710 = vmatpush.bf16.msra.mxu0 %v683
        %711 = vmatpush.bf16.msra.mxu0 %v682
        %712 = vmatpush.bf16.msra.mxu0 %v681
        %713 = vmatpush.bf16.msra.mxu0 %v680
        %714 = vmatpush.bf16.msra.mxu0 %v679
        %715 = vmatpush.bf16.msra.mxu0 %v678
        %716 = vmatpush.bf16.msra.mxu0 %v677
        %717 = vmatmul.bf16.gmra.mxu0 %v549
        %v718 = vpop.f32.mrf.mxu0
        %v719 = vadd.f32 0.0, %v718
        %v720 = vpop.f32.mrf.mxu0
        %v721 = vadd.f32 0.0, %v720
        %722 = vmatmul.bf16.gmra.mxu0 %v551
        %v723 = vpop.f32.mrf.mxu0
        %v724 = vadd.f32 0.0, %v723
        %v725 = vpop.f32.mrf.mxu0
        %v726 = vadd.f32 0.0, %v725
        %727 = vmatmul.bf16.gmra.mxu0 %v553
        %v728 = vpop.f32.mrf.mxu0
        %v729 = vadd.f32 0.0, %v728
        %v730 = vpop.f32.mrf.mxu0
        %v731 = vadd.f32 0.0, %v730
        %732 = vmatmul.bf16.gmra.mxu0 %v555
        %v733 = vpop.f32.mrf.mxu0
        %v734 = vadd.f32 0.0, %v733
        %v735 = vpop.f32.mrf.mxu0
        %v736 = vadd.f32 0.0, %v735
        %737 = vmatmul.bf16.gmra.mxu0 %v557
        %v738 = vpop.f32.mrf.mxu0
        %v739 = vadd.f32 0.0, %v738
        %v740 = vpop.f32.mrf.mxu0
        %v741 = vadd.f32 0.0, %v740
        %742 = vmatmul.bf16.gmra.mxu0 %v559
        %v743 = vpop.f32.mrf.mxu0
        %v744 = vadd.f32 0.0, %v743
        %v745 = vpop.f32.mrf.mxu0
        %v746 = vadd.f32 0.0, %v745
        %747 = vmatmul.bf16.gmra.mxu0 %v561
        %v748 = vpop.f32.mrf.mxu0
        %v749 = vadd.f32 0.0, %v748
        %v750 = vpop.f32.mrf.mxu0
        %v751 = vadd.f32 0.0, %v750
        %752 = vmatmul.bf16.gmra.mxu0 %v563
        %v753 = vpop.f32.mrf.mxu0
        %v754 = vadd.f32 0.0, %v753
        %v755 = vpop.f32.mrf.mxu0
        %v756 = vadd.f32 0.0, %v755
        %757 = vmatmul.bf16.gmra.mxu0 %v565
        %v758 = vpop.f32.mrf.mxu0
        %v759 = vadd.f32 0.0, %v758
        %v760 = vpop.f32.mrf.mxu0
        %v761 = vadd.f32 0.0, %v760
        %762 = vmatmul.bf16.gmra.mxu0 %v567
        %v763 = vpop.f32.mrf.mxu0
        %v764 = vadd.f32 0.0, %v763
        %v765 = vpop.f32.mrf.mxu0
        %v766 = vadd.f32 0.0, %v765
        %767 = vmatmul.bf16.gmra.mxu0 %v569
        %v768 = vpop.f32.mrf.mxu0
        %v769 = vadd.f32 0.0, %v768
        %v770 = vpop.f32.mrf.mxu0
        %v771 = vadd.f32 0.0, %v770
        %772 = vmatmul.bf16.gmra.mxu0 %v571
        %v773 = vpop.f32.mrf.mxu0
        %v774 = vadd.f32 0.0, %v773
        %v775 = vpop.f32.mrf.mxu0
        %v776 = vadd.f32 0.0, %v775
        %777 = vmatmul.bf16.gmra.mxu0 %v573
        %v778 = vpop.f32.mrf.mxu0
        %v779 = vadd.f32 0.0, %v778
        %v780 = vpop.f32.mrf.mxu0
        %v781 = vadd.f32 0.0, %v780
        %782 = vmatmul.bf16.gmra.mxu0 %v575
        %v783 = vpop.f32.mrf.mxu0
        %v784 = vadd.f32 0.0, %v783
        %v785 = vpop.f32.mrf.mxu0
        %v786 = vadd.f32 0.0, %v785
        %787 = vmatmul.bf16.gmra.mxu0 %v577
        %v788 = vpop.f32.mrf.mxu0
        %v789 = vadd.f32 0.0, %v788
        %v790 = vpop.f32.mrf.mxu0
        %v791 = vadd.f32 0.0, %v790
        %792 = vmatmul.bf16.gmra.mxu0 %v579
        %v793 = vpop.f32.mrf.mxu0
        %v794 = vadd.f32 0.0, %v793
        %v795 = vpop.f32.mrf.mxu0
        %v796 = vadd.f32 0.0, %v795
        %797 = vdwg.mxu0
        %798 = vmatpush.bf16.msra.mxu0 %v692
        %799 = vmatpush.bf16.msra.mxu0 %v691
        %800 = vmatpush.bf16.msra.mxu0 %v690
        %801 = vmatpush.bf16.msra.mxu0 %v689
        %802 = vmatpush.bf16.msra.mxu0 %v688
        %803 = vmatpush.bf16.msra.mxu0 %v687
        %804 = vmatpush.bf16.msra.mxu0 %v686
        %805 = vmatpush.bf16.msra.mxu0 %v685
        %806 = vmatmul.bf16.gmra.mxu0 %v550
        %v807 = vpop.f32.mrf.mxu0
        %v808 = vadd.f32 %v719, %v807
        %v809 = vpop.f32.mrf.mxu0
        %v810 = vadd.f32 %v721, %v809
        %811 = vmatmul.bf16.gmra.mxu0 %v552
        %v812 = vpop.f32.mrf.mxu0
        %v813 = vadd.f32 %v724, %v812
        %v814 = vpop.f32.mrf.mxu0
        %v815 = vadd.f32 %v726, %v814
        %816 = vmatmul.bf16.gmra.mxu0 %v554
        %v817 = vpop.f32.mrf.mxu0
        %v818 = vadd.f32 %v729, %v817
        %v819 = vpop.f32.mrf.mxu0
        %v820 = vadd.f32 %v731, %v819
        %821 = vmatmul.bf16.gmra.mxu0 %v556
        %v822 = vpop.f32.mrf.mxu0
        %v823 = vadd.f32 %v734, %v822
        %v824 = vpop.f32.mrf.mxu0
        %v825 = vadd.f32 %v736, %v824
        %826 = vmatmul.bf16.gmra.mxu0 %v558
        %v827 = vpop.f32.mrf.mxu0
        %v828 = vadd.f32 %v739, %v827
        %v829 = vpop.f32.mrf.mxu0
        %v830 = vadd.f32 %v741, %v829
        %831 = vmatmul.bf16.gmra.mxu0 %v560
        %v832 = vpop.f32.mrf.mxu0
        %v833 = vadd.f32 %v744, %v832
        %v834 = vpop.f32.mrf.mxu0
        %v835 = vadd.f32 %v746, %v834
        %836 = vmatmul.bf16.gmra.mxu0 %v562
        %v837 = vpop.f32.mrf.mxu0
        %v838 = vadd.f32 %v749, %v837
        %v839 = vpop.f32.mrf.mxu0
        %v840 = vadd.f32 %v751, %v839
        %841 = vmatmul.bf16.gmra.mxu0 %v564
        %v842 = vpop.f32.mrf.mxu0
        %v843 = vadd.f32 %v754, %v842
        %v844 = vpop.f32.mrf.mxu0
        %v845 = vadd.f32 %v756, %v844
        %846 = vmatmul.bf16.gmra.mxu0 %v566
        %v847 = vpop.f32.mrf.mxu0
        %v848 = vadd.f32 %v759, %v847
        %v849 = vpop.f32.mrf.mxu0
        %v850 = vadd.f32 %v761, %v849
        %851 = vmatmul.bf16.gmra.mxu0 %v568
        %v852 = vpop.f32.mrf.mxu0
        %v853 = vadd.f32 %v764, %v852
        %v854 = vpop.f32.mrf.mxu0
        %v855 = vadd.f32 %v766, %v854
        %856 = vmatmul.bf16.gmra.mxu0 %v570
        %v857 = vpop.f32.mrf.mxu0
        %v858 = vadd.f32 %v769, %v857
        %v859 = vpop.f32.mrf.mxu0
        %v860 = vadd.f32 %v771, %v859
        %861 = vmatmul.bf16.gmra.mxu0 %v572
        %v862 = vpop.f32.mrf.mxu0
        %v863 = vadd.f32 %v774, %v862
        %v864 = vpop.f32.mrf.mxu0
        %v865 = vadd.f32 %v776, %v864
        %866 = vmatmul.bf16.gmra.mxu0 %v574
        %v867 = vpop.f32.mrf.mxu0
        %v868 = vadd.f32 %v779, %v867
        %v869 = vpop.f32.mrf.mxu0
        %v870 = vadd.f32 %v781, %v869
        %871 = vmatmul.bf16.gmra.mxu0 %v576
        %v872 = vpop.f32.mrf.mxu0
        %v873 = vadd.f32 %v784, %v872
        %v874 = vpop.f32.mrf.mxu0
        %v875 = vadd.f32 %v786, %v874
        %876 = vmatmul.bf16.gmra.mxu0 %v578
        %v877 = vpop.f32.mrf.mxu0
        %v878 = vadd.f32 %v789, %v877
        %v879 = vpop.f32.mrf.mxu0
        %v880 = vadd.f32 %v791, %v879
        %881 = vmatmul.bf16.gmra.mxu0 %v580
        %v882 = vpop.f32.mrf.mxu0
        %v883 = vadd.f32 %v794, %v882
        %v884 = vpop.f32.mrf.mxu0
        %v885 = vadd.f32 %v796, %v884
        %886 = vdwg.mxu0
        // Predicated region
        $region38: #{tpu_custom_call.1} parent=23 // pred_check
          %p887 = pneg %p163
        $region39: #{tpu_custom_call.1} parent=23 // pred_check_branch
          %889 = sbr.rel (%p887) target = $region41
        $region40: #{tpu_custom_call.1} parent=23 // pred_region
          %890 = vst [vmem:[#allocation4] sm:$0xff] %v808
          %891 = vst [vmem:[#allocation4 + $0x8] sm:$0xff] %v810
          %892 = vst [vmem:[#allocation4 + $0x10] sm:$0xff] %v813
          %893 = vst [vmem:[#allocation4 + $0x18] sm:$0xff] %v815
          %894 = vst [vmem:[#allocation4 + $0x20] sm:$0xff] %v818
          %895 = vst [vmem:[#allocation4 + $0x28] sm:$0xff] %v820
          %896 = vst [vmem:[#allocation4 + $0x30] sm:$0xff] %v823
          %897 = vst [vmem:[#allocation4 + $0x38] sm:$0xff] %v825
          %898 = vst [vmem:[#allocation4 + $0x40] sm:$0xff] %v828
          %899 = vst [vmem:[#allocation4 + $0x48] sm:$0xff] %v830
          %900 = vst [vmem:[#allocation4 + $0x50] sm:$0xff] %v833
          %901 = vst [vmem:[#allocation4 + $0x58] sm:$0xff] %v835
          %902 = vst [vmem:[#allocation4 + $0x60] sm:$0xff] %v838
          %903 = vst [vmem:[#allocation4 + $0x68] sm:$0xff] %v840
          %904 = vst [vmem:[#allocation4 + $0x70] sm:$0xff] %v843
          %905 = vst [vmem:[#allocation4 + $0x78] sm:$0xff] %v845
          %906 = vst [vmem:[#allocation4 + $0x80] sm:$0xff] %v848
          %907 = vst [vmem:[#allocation4 + $0x88] sm:$0xff] %v850
          %908 = vst [vmem:[#allocation4 + $0x90] sm:$0xff] %v853
          %909 = vst [vmem:[#allocation4 + $0x98] sm:$0xff] %v855
          %910 = vst [vmem:[#allocation4 + $0xa0] sm:$0xff] %v858
          %911 = vst [vmem:[#allocation4 + $0xa8] sm:$0xff] %v860
          %912 = vst [vmem:[#allocation4 + $0xb0] sm:$0xff] %v863
          %913 = vst [vmem:[#allocation4 + $0xb8] sm:$0xff] %v865
          %914 = vst [vmem:[#allocation4 + $0xc0] sm:$0xff] %v868
          %915 = vst [vmem:[#allocation4 + $0xc8] sm:$0xff] %v870
          %916 = vst [vmem:[#allocation4 + $0xd0] sm:$0xff] %v873
          %917 = vst [vmem:[#allocation4 + $0xd8] sm:$0xff] %v875
          %918 = vst [vmem:[#allocation4 + $0xe0] sm:$0xff] %v878
          %919 = vst [vmem:[#allocation4 + $0xe8] sm:$0xff] %v880
          %920 = vst [vmem:[#allocation4 + $0xf0] sm:$0xff] %v883
          %921 = vst [vmem:[#allocation4 + $0xf8] sm:$0xff] %v885
        $region41: #{tpu_custom_call.1} parent=23 // pred_fallthru
          _
        %p922 = scmp.gt.s32.totalorder %s24, 0
        // Predicated region
        $region42: #{tpu_custom_call.1} parent=23 // pred_check
          %p923 = pneg %p922
        $region43: #{tpu_custom_call.1} parent=23 // pred_check_branch
          %925 = sbr.rel (%p923) target = $region45
        $region44: #{tpu_custom_call.1} parent=23 // pred_region
          %v926 = vld [vmem:[#allocation4] sm:$0xff]
          %v927 = vld [vmem:[#allocation4 + $0x8] sm:$0xff]
          %v928 = vld [vmem:[#allocation4 + $0x10] sm:$0xff]
          %v929 = vld [vmem:[#allocation4 + $0x18] sm:$0xff]
          %v930 = vld [vmem:[#allocation4 + $0x20] sm:$0xff]
          %v931 = vld [vmem:[#allocation4 + $0x28] sm:$0xff]
          %v932 = vld [vmem:[#allocation4 + $0x30] sm:$0xff]
          %v933 = vld [vmem:[#allocation4 + $0x38] sm:$0xff]
          %v934 = vld [vmem:[#allocation4 + $0x40] sm:$0xff]
          %v935 = vld [vmem:[#allocation4 + $0x48] sm:$0xff]
          %v936 = vld [vmem:[#allocation4 + $0x50] sm:$0xff]
          %v937 = vld [vmem:[#allocation4 + $0x58] sm:$0xff]
          %v938 = vld [vmem:[#allocation4 + $0x60] sm:$0xff]
          %v939 = vld [vmem:[#allocation4 + $0x68] sm:$0xff]
          %v940 = vld [vmem:[#allocation4 + $0x70] sm:$0xff]
          %v941 = vld [vmem:[#allocation4 + $0x78] sm:$0xff]
          %v942 = vld [vmem:[#allocation4 + $0x80] sm:$0xff]
          %v943 = vld [vmem:[#allocation4 + $0x88] sm:$0xff]
          %v944 = vld [vmem:[#allocation4 + $0x90] sm:$0xff]
          %v945 = vld [vmem:[#allocation4 + $0x98] sm:$0xff]
          %v946 = vld [vmem:[#allocation4 + $0xa0] sm:$0xff]
          %v947 = vld [vmem:[#allocation4 + $0xa8] sm:$0xff]
          %v948 = vld [vmem:[#allocation4 + $0xb0] sm:$0xff]
          %v949 = vld [vmem:[#allocation4 + $0xb8] sm:$0xff]
          %v950 = vld [vmem:[#allocation4 + $0xc0] sm:$0xff]
          %v951 = vld [vmem:[#allocation4 + $0xc8] sm:$0xff]
          %v952 = vld [vmem:[#allocation4 + $0xd0] sm:$0xff]
          %v953 = vld [vmem:[#allocation4 + $0xd8] sm:$0xff]
          %v954 = vld [vmem:[#allocation4 + $0xe0] sm:$0xff]
          %v955 = vld [vmem:[#allocation4 + $0xe8] sm:$0xff]
          %v956 = vld [vmem:[#allocation4 + $0xf0] sm:$0xff]
          %v957 = vld [vmem:[#allocation4 + $0xf8] sm:$0xff]
          %v958 = vadd.f32 %v926, %v808
          %v959 = vadd.f32 %v927, %v810
          %v960 = vadd.f32 %v928, %v813
          %v961 = vadd.f32 %v929, %v815
          %v962 = vadd.f32 %v930, %v818
          %v963 = vadd.f32 %v931, %v820
          %v964 = vadd.f32 %v932, %v823
          %v965 = vadd.f32 %v933, %v825
          %v966 = vadd.f32 %v934, %v828
          %v967 = vadd.f32 %v935, %v830
          %v968 = vadd.f32 %v936, %v833
          %v969 = vadd.f32 %v937, %v835
          %v970 = vadd.f32 %v938, %v838
          %v971 = vadd.f32 %v939, %v840
          %v972 = vadd.f32 %v940, %v843
          %v973 = vadd.f32 %v941, %v845
          %v974 = vadd.f32 %v942, %v848
          %v975 = vadd.f32 %v943, %v850
          %v976 = vadd.f32 %v944, %v853
          %v977 = vadd.f32 %v945, %v855
          %v978 = vadd.f32 %v946, %v858
          %v979 = vadd.f32 %v947, %v860
          %v980 = vadd.f32 %v948, %v863
          %v981 = vadd.f32 %v949, %v865
          %v982 = vadd.f32 %v950, %v868
          %v983 = vadd.f32 %v951, %v870
          %v984 = vadd.f32 %v952, %v873
          %v985 = vadd.f32 %v953, %v875
          %v986 = vadd.f32 %v954, %v878
          %v987 = vadd.f32 %v955, %v880
          %v988 = vadd.f32 %v956, %v883
          %v989 = vadd.f32 %v957, %v885
          %990 = vst [vmem:[#allocation4] sm:$0xff] %v958
          %991 = vst [vmem:[#allocation4 + $0x8] sm:$0xff] %v959
          %992 = vst [vmem:[#allocation4 + $0x10] sm:$0xff] %v960
          %993 = vst [vmem:[#allocation4 + $0x18] sm:$0xff] %v961
          %994 = vst [vmem:[#allocation4 + $0x20] sm:$0xff] %v962
          %995 = vst [vmem:[#allocation4 + $0x28] sm:$0xff] %v963
          %996 = vst [vmem:[#allocation4 + $0x30] sm:$0xff] %v964
          %997 = vst [vmem:[#allocation4 + $0x38] sm:$0xff] %v965
          %998 = vst [vmem:[#allocation4 + $0x40] sm:$0xff] %v966
          %999 = vst [vmem:[#allocation4 + $0x48] sm:$0xff] %v967
          %1000 = vst [vmem:[#allocation4 + $0x50] sm:$0xff] %v968
          %1001 = vst [vmem:[#allocation4 + $0x58] sm:$0xff] %v969
          %1002 = vst [vmem:[#allocation4 + $0x60] sm:$0xff] %v970
          %1003 = vst [vmem:[#allocation4 + $0x68] sm:$0xff] %v971
          %1004 = vst [vmem:[#allocation4 + $0x70] sm:$0xff] %v972
          %1005 = vst [vmem:[#allocation4 + $0x78] sm:$0xff] %v973
          %1006 = vst [vmem:[#allocation4 + $0x80] sm:$0xff] %v974
          %1007 = vst [vmem:[#allocation4 + $0x88] sm:$0xff] %v975
          %1008 = vst [vmem:[#allocation4 + $0x90] sm:$0xff] %v976
          %1009 = vst [vmem:[#allocation4 + $0x98] sm:$0xff] %v977
          %1010 = vst [vmem:[#allocation4 + $0xa0] sm:$0xff] %v978
          %1011 = vst [vmem:[#allocation4 + $0xa8] sm:$0xff] %v979
          %1012 = vst [vmem:[#allocation4 + $0xb0] sm:$0xff] %v980
          %1013 = vst [vmem:[#allocation4 + $0xb8] sm:$0xff] %v981
          %1014 = vst [vmem:[#allocation4 + $0xc0] sm:$0xff] %v982
          %1015 = vst [vmem:[#allocation4 + $0xc8] sm:$0xff] %v983
          %1016 = vst [vmem:[#allocation4 + $0xd0] sm:$0xff] %v984
          %1017 = vst [vmem:[#allocation4 + $0xd8] sm:$0xff] %v985
          %1018 = vst [vmem:[#allocation4 + $0xe0] sm:$0xff] %v986
          %1019 = vst [vmem:[#allocation4 + $0xe8] sm:$0xff] %v987
          %1020 = vst [vmem:[#allocation4 + $0xf0] sm:$0xff] %v988
          %1021 = vst [vmem:[#allocation4 + $0xf8] sm:$0xff] %v989
        $region45: #{tpu_custom_call.1} parent=23 // pred_fallthru
          _
        // Predicated region
        $region46: #{tpu_custom_call.1} parent=23 // pred_check
          %p1022 = pneg %p133
        $region47: #{tpu_custom_call.1} parent=23 // pred_check_branch
          %1024 = sbr.rel (%p1022) target = $region49
        $region48: #{tpu_custom_call.1} parent=23 // pred_region
          %s1025 = scalar_lea.vmem [#allocation3], %s134
          %v1026 = vld [vmem:[%s1025] sm:$0xff]
          %v1027 = vld [vmem:[%s1025 + $0x8] sm:$0xff]
          %v1028 = vld [vmem:[%s1025 + $0x10] sm:$0xff]
          %v1029 = vld [vmem:[%s1025 + $0x18] sm:$0xff]
          %v1030 = vld [vmem:[%s1025 + $0x20] sm:$0xff]
          %v1031 = vld [vmem:[%s1025 + $0x28] sm:$0xff]
          %v1032 = vld [vmem:[%s1025 + $0x30] sm:$0xff]
          %v1033 = vld [vmem:[%s1025 + $0x38] sm:$0xff]
          %v1034 = vld [vmem:[%s1025 + $0x40] sm:$0xff]
          %v1035 = vld [vmem:[%s1025 + $0x48] sm:$0xff]
          %v1036 = vld [vmem:[%s1025 + $0x50] sm:$0xff]
          %v1037 = vld [vmem:[%s1025 + $0x58] sm:$0xff]
          %v1038 = vld [vmem:[%s1025 + $0x60] sm:$0xff]
          %v1039 = vld [vmem:[%s1025 + $0x68] sm:$0xff]
          %v1040 = vld [vmem:[%s1025 + $0x70] sm:$0xff]
          %v1041 = vld [vmem:[%s1025 + $0x78] sm:$0xff]
          %v1042 = vld [vmem:[%s1025 + $0x80] sm:$0xff]
          %v1043 = vld [vmem:[%s1025 + $0x88] sm:$0xff]
          %v1044 = vld [vmem:[%s1025 + $0x90] sm:$0xff]
          %v1045 = vld [vmem:[%s1025 + $0x98] sm:$0xff]
          %v1046 = vld [vmem:[%s1025 + $0xa0] sm:$0xff]
          %v1047 = vld [vmem:[%s1025 + $0xa8] sm:$0xff]
          %v1048 = vld [vmem:[%s1025 + $0xb0] sm:$0xff]
          %v1049 = vld [vmem:[%s1025 + $0xb8] sm:$0xff]
          %v1050 = vld [vmem:[%s1025 + $0xc0] sm:$0xff]
          %v1051 = vld [vmem:[%s1025 + $0xc8] sm:$0xff]
          %v1052 = vld [vmem:[%s1025 + $0xd0] sm:$0xff]
          %v1053 = vld [vmem:[%s1025 + $0xd8] sm:$0xff]
          %v1054 = vld [vmem:[%s1025 + $0xe0] sm:$0xff]
          %v1055 = vld [vmem:[%s1025 + $0xe8] sm:$0xff]
          %v1056 = vld [vmem:[%s1025 + $0xf0] sm:$0xff]
          %v1057 = vld [vmem:[%s1025 + $0xf8] sm:$0xff]
          %v1058 = vld [vmem:[#allocation4] sm:$0xff]
          %v1059 = vld [vmem:[#allocation4 + $0x8] sm:$0xff]
          %v1060 = vld [vmem:[#allocation4 + $0x10] sm:$0xff]
          %v1061 = vld [vmem:[#allocation4 + $0x18] sm:$0xff]
          %v1062 = vld [vmem:[#allocation4 + $0x20] sm:$0xff]
          %v1063 = vld [vmem:[#allocation4 + $0x28] sm:$0xff]
          %v1064 = vld [vmem:[#allocation4 + $0x30] sm:$0xff]
          %v1065 = vld [vmem:[#allocation4 + $0x38] sm:$0xff]
          %v1066 = vld [vmem:[#allocation4 + $0x40] sm:$0xff]
          %v1067 = vld [vmem:[#allocation4 + $0x48] sm:$0xff]
          %v1068 = vld [vmem:[#allocation4 + $0x50] sm:$0xff]
          %v1069 = vld [vmem:[#allocation4 + $0x58] sm:$0xff]
          %v1070 = vld [vmem:[#allocation4 + $0x60] sm:$0xff]
          %v1071 = vld [vmem:[#allocation4 + $0x68] sm:$0xff]
          %v1072 = vld [vmem:[#allocation4 + $0x70] sm:$0xff]
          %v1073 = vld [vmem:[#allocation4 + $0x78] sm:$0xff]
          %v1074 = vld [vmem:[#allocation4 + $0x80] sm:$0xff]
          %v1075 = vld [vmem:[#allocation4 + $0x88] sm:$0xff]
          %v1076 = vld [vmem:[#allocation4 + $0x90] sm:$0xff]
          %v1077 = vld [vmem:[#allocation4 + $0x98] sm:$0xff]
          %v1078 = vld [vmem:[#allocation4 + $0xa0] sm:$0xff]
          %v1079 = vld [vmem:[#allocation4 + $0xa8] sm:$0xff]
          %v1080 = vld [vmem:[#allocation4 + $0xb0] sm:$0xff]
          %v1081 = vld [vmem:[#allocation4 + $0xb8] sm:$0xff]
          %v1082 = vld [vmem:[#allocation4 + $0xc0] sm:$0xff]
          %v1083 = vld [vmem:[#allocation4 + $0xc8] sm:$0xff]
          %v1084 = vld [vmem:[#allocation4 + $0xd0] sm:$0xff]
          %v1085 = vld [vmem:[#allocation4 + $0xd8] sm:$0xff]
          %v1086 = vld [vmem:[#allocation4 + $0xe0] sm:$0xff]
          %v1087 = vld [vmem:[#allocation4 + $0xe8] sm:$0xff]
          %v1088 = vld [vmem:[#allocation4 + $0xf0] sm:$0xff]
          %v1089 = vld [vmem:[#allocation4 + $0xf8] sm:$0xff]
          %v1090 = vadd.f32 %v1026, %v1058
          %v1091 = vadd.f32 %v1027, %v1059
          %v1092 = vadd.f32 %v1028, %v1060
          %v1093 = vadd.f32 %v1029, %v1061
          %v1094 = vadd.f32 %v1030, %v1062
          %v1095 = vadd.f32 %v1031, %v1063
          %v1096 = vadd.f32 %v1032, %v1064
          %v1097 = vadd.f32 %v1033, %v1065
          %v1098 = vadd.f32 %v1034, %v1066
          %v1099 = vadd.f32 %v1035, %v1067
          %v1100 = vadd.f32 %v1036, %v1068
          %v1101 = vadd.f32 %v1037, %v1069
          %v1102 = vadd.f32 %v1038, %v1070
          %v1103 = vadd.f32 %v1039, %v1071
          %v1104 = vadd.f32 %v1040, %v1072
          %v1105 = vadd.f32 %v1041, %v1073
          %v1106 = vadd.f32 %v1042, %v1074
          %v1107 = vadd.f32 %v1043, %v1075
          %v1108 = vadd.f32 %v1044, %v1076
          %v1109 = vadd.f32 %v1045, %v1077
          %v1110 = vadd.f32 %v1046, %v1078
          %v1111 = vadd.f32 %v1047, %v1079
          %v1112 = vadd.f32 %v1048, %v1080
          %v1113 = vadd.f32 %v1049, %v1081
          %v1114 = vadd.f32 %v1050, %v1082
          %v1115 = vadd.f32 %v1051, %v1083
          %v1116 = vadd.f32 %v1052, %v1084
          %v1117 = vadd.f32 %v1053, %v1085
          %v1118 = vadd.f32 %v1054, %v1086
          %v1119 = vadd.f32 %v1055, %v1087
          %v1120 = vadd.f32 %v1056, %v1088
          %v1121 = vadd.f32 %v1057, %v1089
          %1122 = vst [vmem:[%s1025] sm:$0xff] %v1090
          %1123 = vst [vmem:[%s1025 + $0x8] sm:$0xff] %v1091
          %1124 = vst [vmem:[%s1025 + $0x10] sm:$0xff] %v1092
          %1125 = vst [vmem:[%s1025 + $0x18] sm:$0xff] %v1093
          %1126 = vst [vmem:[%s1025 + $0x20] sm:$0xff] %v1094
          %1127 = vst [vmem:[%s1025 + $0x28] sm:$0xff] %v1095
          %1128 = vst [vmem:[%s1025 + $0x30] sm:$0xff] %v1096
          %1129 = vst [vmem:[%s1025 + $0x38] sm:$0xff] %v1097
          %1130 = vst [vmem:[%s1025 + $0x40] sm:$0xff] %v1098
          %1131 = vst [vmem:[%s1025 + $0x48] sm:$0xff] %v1099
          %1132 = vst [vmem:[%s1025 + $0x50] sm:$0xff] %v1100
          %1133 = vst [vmem:[%s1025 + $0x58] sm:$0xff] %v1101
          %1134 = vst [vmem:[%s1025 + $0x60] sm:$0xff] %v1102
          %1135 = vst [vmem:[%s1025 + $0x68] sm:$0xff] %v1103
          %1136 = vst [vmem:[%s1025 + $0x70] sm:$0xff] %v1104
          %1137 = vst [vmem:[%s1025 + $0x78] sm:$0xff] %v1105
          %1138 = vst [vmem:[%s1025 + $0x80] sm:$0xff] %v1106
          %1139 = vst [vmem:[%s1025 + $0x88] sm:$0xff] %v1107
          %1140 = vst [vmem:[%s1025 + $0x90] sm:$0xff] %v1108
          %1141 = vst [vmem:[%s1025 + $0x98] sm:$0xff] %v1109
          %1142 = vst [vmem:[%s1025 + $0xa0] sm:$0xff] %v1110
          %1143 = vst [vmem:[%s1025 + $0xa8] sm:$0xff] %v1111
          %1144 = vst [vmem:[%s1025 + $0xb0] sm:$0xff] %v1112
          %1145 = vst [vmem:[%s1025 + $0xb8] sm:$0xff] %v1113
          %1146 = vst [vmem:[%s1025 + $0xc0] sm:$0xff] %v1114
          %1147 = vst [vmem:[%s1025 + $0xc8] sm:$0xff] %v1115
          %1148 = vst [vmem:[%s1025 + $0xd0] sm:$0xff] %v1116
          %1149 = vst [vmem:[%s1025 + $0xd8] sm:$0xff] %v1117
          %1150 = vst [vmem:[%s1025 + $0xe0] sm:$0xff] %v1118
          %1151 = vst [vmem:[%s1025 + $0xe8] sm:$0xff] %v1119
          %1152 = vst [vmem:[%s1025 + $0xf0] sm:$0xff] %v1120
          %1153 = vst [vmem:[%s1025 + $0xf8] sm:$0xff] %v1121
        $region49: #{tpu_custom_call.1} parent=23 // pred_fallthru
          _
        %p1154 = scmp.lt.s32.totalorder %s22, 2
        %p1155 = pnand %p133, %p1154
        %p1156 = pneg %p1155
        // Predicated region
        $region50: #{tpu_custom_call.1} parent=23 // pred_check
          _
        $region51: #{tpu_custom_call.1} parent=23 // pred_check_branch
          %1158 = sbr.rel (%p1155) target = $region53
        $region52: #{tpu_custom_call.1} parent=23 // pred_region
          %v1159 = vld [vmem:[#allocation4] sm:$0xff]
          %v1160 = vld [vmem:[#allocation4 + $0x8] sm:$0xff]
          %v1161 = vld [vmem:[#allocation4 + $0x10] sm:$0xff]
          %v1162 = vld [vmem:[#allocation4 + $0x18] sm:$0xff]
          %v1163 = vld [vmem:[#allocation4 + $0x20] sm:$0xff]
          %v1164 = vld [vmem:[#allocation4 + $0x28] sm:$0xff]
          %v1165 = vld [vmem:[#allocation4 + $0x30] sm:$0xff]
          %v1166 = vld [vmem:[#allocation4 + $0x38] sm:$0xff]
          %v1167 = vld [vmem:[#allocation4 + $0x40] sm:$0xff]
          %v1168 = vld [vmem:[#allocation4 + $0x48] sm:$0xff]
          %v1169 = vld [vmem:[#allocation4 + $0x50] sm:$0xff]
          %v1170 = vld [vmem:[#allocation4 + $0x58] sm:$0xff]
          %v1171 = vld [vmem:[#allocation4 + $0x60] sm:$0xff]
          %v1172 = vld [vmem:[#allocation4 + $0x68] sm:$0xff]
          %v1173 = vld [vmem:[#allocation4 + $0x70] sm:$0xff]
          %v1174 = vld [vmem:[#allocation4 + $0x78] sm:$0xff]
          %v1175 = vld [vmem:[#allocation4 + $0x80] sm:$0xff]
          %v1176 = vld [vmem:[#allocation4 + $0x88] sm:$0xff]
          %v1177 = vld [vmem:[#allocation4 + $0x90] sm:$0xff]
          %v1178 = vld [vmem:[#allocation4 + $0x98] sm:$0xff]
          %v1179 = vld [vmem:[#allocation4 + $0xa0] sm:$0xff]
          %v1180 = vld [vmem:[#allocation4 + $0xa8] sm:$0xff]
          %v1181 = vld [vmem:[#allocation4 + $0xb0] sm:$0xff]
          %v1182 = vld [vmem:[#allocation4 + $0xb8] sm:$0xff]
          %v1183 = vld [vmem:[#allocation4 + $0xc0] sm:$0xff]
          %v1184 = vld [vmem:[#allocation4 + $0xc8] sm:$0xff]
          %v1185 = vld [vmem:[#allocation4 + $0xd0] sm:$0xff]
          %v1186 = vld [vmem:[#allocation4 + $0xd8] sm:$0xff]
          %v1187 = vld [vmem:[#allocation4 + $0xe0] sm:$0xff]
          %v1188 = vld [vmem:[#allocation4 + $0xe8] sm:$0xff]
          %v1189 = vld [vmem:[#allocation4 + $0xf0] sm:$0xff]
          %v1190 = vld [vmem:[#allocation4 + $0xf8] sm:$0xff]
          %v1191 = vpack.c.bf16 %v1159, %v1159
          %v1192 = vpack.c.bf16 %v1160, %v1160
          %v1193 = vpack.c.bf16 %v1161, %v1161
          %v1194 = vpack.c.bf16 %v1162, %v1162
          %v1195 = vpack.c.bf16 %v1163, %v1163
          %v1196 = vpack.c.bf16 %v1164, %v1164
          %v1197 = vpack.c.bf16 %v1165, %v1165
          %v1198 = vpack.c.bf16 %v1166, %v1166
          %v1199 = vpack.c.bf16 %v1167, %v1167
          %v1200 = vpack.c.bf16 %v1168, %v1168
          %v1201 = vpack.c.bf16 %v1169, %v1169
          %v1202 = vpack.c.bf16 %v1170, %v1170
          %v1203 = vpack.c.bf16 %v1171, %v1171
          %v1204 = vpack.c.bf16 %v1172, %v1172
          %v1205 = vpack.c.bf16 %v1173, %v1173
          %v1206 = vpack.c.bf16 %v1174, %v1174
          %v1207 = vpack.c.bf16 %v1175, %v1175
          %v1208 = vpack.c.bf16 %v1176, %v1176
          %v1209 = vpack.c.bf16 %v1177, %v1177
          %v1210 = vpack.c.bf16 %v1178, %v1178
          %v1211 = vpack.c.bf16 %v1179, %v1179
          %v1212 = vpack.c.bf16 %v1180, %v1180
          %v1213 = vpack.c.bf16 %v1181, %v1181
          %v1214 = vpack.c.bf16 %v1182, %v1182
          %v1215 = vpack.c.bf16 %v1183, %v1183
          %v1216 = vpack.c.bf16 %v1184, %v1184
          %v1217 = vpack.c.bf16 %v1185, %v1185
          %v1218 = vpack.c.bf16 %v1186, %v1186
          %v1219 = vpack.c.bf16 %v1187, %v1187
          %v1220 = vpack.c.bf16 %v1188, %v1188
          %v1221 = vpack.c.bf16 %v1189, %v1189
          %v1222 = vpack.c.bf16 %v1190, %v1190
          %s1223 = sshra.s32 %s134, 3
          %s1224 = sand.u32 %s134, 7
          %s1225 = smul.u32 %s160, 64
          %s1226 = sadd.s32 %s1223, %s1225
          %s1227 = smul.addr %s1226, 4
          %s1228 = scalar_lea.vmem [#allocation2], %s1227
          %1229 = vst [vmem:[%s1228] sm:$0xf] %v1191
          %1230 = vst [vmem:[%s1228 + $0x4] sm:$0xf] %v1192
          %1231 = vst [vmem:[%s1228 + $0x8] sm:$0xf] %v1193
          %1232 = vst [vmem:[%s1228 + $0xc] sm:$0xf] %v1194
          %1233 = vst [vmem:[%s1228 + $0x10] sm:$0xf] %v1195
          %1234 = vst [vmem:[%s1228 + $0x14] sm:$0xf] %v1196
          %1235 = vst [vmem:[%s1228 + $0x18] sm:$0xf] %v1197
          %1236 = vst [vmem:[%s1228 + $0x1c] sm:$0xf] %v1198
          %1237 = vst [vmem:[%s1228 + $0x20] sm:$0xf] %v1199
          %1238 = vst [vmem:[%s1228 + $0x24] sm:$0xf] %v1200
          %1239 = vst [vmem:[%s1228 + $0x28] sm:$0xf] %v1201
          %1240 = vst [vmem:[%s1228 + $0x2c] sm:$0xf] %v1202
          %1241 = vst [vmem:[%s1228 + $0x30] sm:$0xf] %v1203
          %1242 = vst [vmem:[%s1228 + $0x34] sm:$0xf] %v1204
          %1243 = vst [vmem:[%s1228 + $0x38] sm:$0xf] %v1205
          %1244 = vst [vmem:[%s1228 + $0x3c] sm:$0xf] %v1206
          %1245 = vst [vmem:[%s1228 + $0x40] sm:$0xf] %v1207
          %1246 = vst [vmem:[%s1228 + $0x44] sm:$0xf] %v1208
          %1247 = vst [vmem:[%s1228 + $0x48] sm:$0xf] %v1209
          %1248 = vst [vmem:[%s1228 + $0x4c] sm:$0xf] %v1210
          %1249 = vst [vmem:[%s1228 + $0x50] sm:$0xf] %v1211
          %1250 = vst [vmem:[%s1228 + $0x54] sm:$0xf] %v1212
          %1251 = vst [vmem:[%s1228 + $0x58] sm:$0xf] %v1213
          %1252 = vst [vmem:[%s1228 + $0x5c] sm:$0xf] %v1214
          %1253 = vst [vmem:[%s1228 + $0x60] sm:$0xf] %v1215
          %1254 = vst [vmem:[%s1228 + $0x64] sm:$0xf] %v1216
          %1255 = vst [vmem:[%s1228 + $0x68] sm:$0xf] %v1217
          %1256 = vst [vmem:[%s1228 + $0x6c] sm:$0xf] %v1218
          %1257 = vst [vmem:[%s1228 + $0x70] sm:$0xf] %v1219
          %1258 = vst [vmem:[%s1228 + $0x74] sm:$0xf] %v1220
          %1259 = vst [vmem:[%s1228 + $0x78] sm:$0xf] %v1221
          %1260 = vst [vmem:[%s1228 + $0x7c] sm:$0xf] %v1222
        $region53: #{tpu_custom_call.1} parent=23 // pred_fallthru
          _
        %p1261 = scmp.eq.s32.totalorder %s22, 2
        %p1262 = pnand %p133, %p1261
        %p1263 = pneg %p1262
        // Predicated region
        $region54: #{tpu_custom_call.1} parent=23 // pred_check
          _
        $region55: #{tpu_custom_call.1} parent=23 // pred_check_branch
          %1265 = sbr.rel (%p1262) target = $region57
        $region56: #{tpu_custom_call.1} parent=23 // pred_region
          %s1266 = scalar_lea.vmem [#allocation3], %s134
          %v1267 = vld [vmem:[%s1266] sm:$0xff]
          %v1268 = vld [vmem:[%s1266 + $0x8] sm:$0xff]
          %v1269 = vld [vmem:[%s1266 + $0x10] sm:$0xff]
          %v1270 = vld [vmem:[%s1266 + $0x18] sm:$0xff]
          %v1271 = vld [vmem:[%s1266 + $0x20] sm:$0xff]
          %v1272 = vld [vmem:[%s1266 + $0x28] sm:$0xff]
          %v1273 = vld [vmem:[%s1266 + $0x30] sm:$0xff]
          %v1274 = vld [vmem:[%s1266 + $0x38] sm:$0xff]
          %v1275 = vld [vmem:[%s1266 + $0x40] sm:$0xff]
          %v1276 = vld [vmem:[%s1266 + $0x48] sm:$0xff]
          %v1277 = vld [vmem:[%s1266 + $0x50] sm:$0xff]
          %v1278 = vld [vmem:[%s1266 + $0x58] sm:$0xff]
          %v1279 = vld [vmem:[%s1266 + $0x60] sm:$0xff]
          %v1280 = vld [vmem:[%s1266 + $0x68] sm:$0xff]
          %v1281 = vld [vmem:[%s1266 + $0x70] sm:$0xff]
          %v1282 = vld [vmem:[%s1266 + $0x78] sm:$0xff]
          %v1283 = vld [vmem:[%s1266 + $0x80] sm:$0xff]
          %v1284 = vld [vmem:[%s1266 + $0x88] sm:$0xff]
          %v1285 = vld [vmem:[%s1266 + $0x90] sm:$0xff]
          %v1286 = vld [vmem:[%s1266 + $0x98] sm:$0xff]
          %v1287 = vld [vmem:[%s1266 + $0xa0] sm:$0xff]
          %v1288 = vld [vmem:[%s1266 + $0xa8] sm:$0xff]
          %v1289 = vld [vmem:[%s1266 + $0xb0] sm:$0xff]
          %v1290 = vld [vmem:[%s1266 + $0xb8] sm:$0xff]
          %v1291 = vld [vmem:[%s1266 + $0xc0] sm:$0xff]
          %v1292 = vld [vmem:[%s1266 + $0xc8] sm:$0xff]
          %v1293 = vld [vmem:[%s1266 + $0xd0] sm:$0xff]
          %v1294 = vld [vmem:[%s1266 + $0xd8] sm:$0xff]
          %v1295 = vld [vmem:[%s1266 + $0xe0] sm:$0xff]
          %v1296 = vld [vmem:[%s1266 + $0xe8] sm:$0xff]
          %v1297 = vld [vmem:[%s1266 + $0xf0] sm:$0xff]
          %v1298 = vld [vmem:[%s1266 + $0xf8] sm:$0xff]
          %v1299 = vmul.f32 %v1267, 0.25
          %v1300 = vmul.f32 %v1268, 0.25
          %v1301 = vmul.f32 %v1269, 0.25
          %v1302 = vmul.f32 %v1270, 0.25
          %v1303 = vmul.f32 %v1271, 0.25
          %v1304 = vmul.f32 %v1272, 0.25
          %v1305 = vmul.f32 %v1273, 0.25
          %v1306 = vmul.f32 %v1274, 0.25
          %v1307 = vmul.f32 %v1275, 0.25
          %v1308 = vmul.f32 %v1276, 0.25
          %v1309 = vmul.f32 %v1277, 0.25
          %v1310 = vmul.f32 %v1278, 0.25
          %v1311 = vmul.f32 %v1279, 0.25
          %v1312 = vmul.f32 %v1280, 0.25
          %v1313 = vmul.f32 %v1281, 0.25
          %v1314 = vmul.f32 %v1282, 0.25
          %v1315 = vmul.f32 %v1283, 0.25
          %v1316 = vmul.f32 %v1284, 0.25
          %v1317 = vmul.f32 %v1285, 0.25
          %v1318 = vmul.f32 %v1286, 0.25
          %v1319 = vmul.f32 %v1287, 0.25
          %v1320 = vmul.f32 %v1288, 0.25
          %v1321 = vmul.f32 %v1289, 0.25
          %v1322 = vmul.f32 %v1290, 0.25
          %v1323 = vmul.f32 %v1291, 0.25
          %v1324 = vmul.f32 %v1292, 0.25
          %v1325 = vmul.f32 %v1293, 0.25
          %v1326 = vmul.f32 %v1294, 0.25
          %v1327 = vmul.f32 %v1295, 0.25
          %v1328 = vmul.f32 %v1296, 0.25
          %v1329 = vmul.f32 %v1297, 0.25
          %v1330 = vmul.f32 %v1298, 0.25
          %1331 = vst [vmem:[%s131] sm:$0xff] %v1299
          %1332 = vst [vmem:[%s131 + $0x8] sm:$0xff] %v1300
          %1333 = vst [vmem:[%s131 + $0x10] sm:$0xff] %v1301
          %1334 = vst [vmem:[%s131 + $0x18] sm:$0xff] %v1302
          %1335 = vst [vmem:[%s131 + $0x20] sm:$0xff] %v1303
          %1336 = vst [vmem:[%s131 + $0x28] sm:$0xff] %v1304
          %1337 = vst [vmem:[%s131 + $0x30] sm:$0xff] %v1305
          %1338 = vst [vmem:[%s131 + $0x38] sm:$0xff] %v1306
          %1339 = vst [vmem:[%s131 + $0x40] sm:$0xff] %v1307
          %1340 = vst [vmem:[%s131 + $0x48] sm:$0xff] %v1308
          %1341 = vst [vmem:[%s131 + $0x50] sm:$0xff] %v1309
          %1342 = vst [vmem:[%s131 + $0x58] sm:$0xff] %v1310
          %1343 = vst [vmem:[%s131 + $0x60] sm:$0xff] %v1311
          %1344 = vst [vmem:[%s131 + $0x68] sm:$0xff] %v1312
          %1345 = vst [vmem:[%s131 + $0x70] sm:$0xff] %v1313
          %1346 = vst [vmem:[%s131 + $0x78] sm:$0xff] %v1314
          %1347 = vst [vmem:[%s131 + $0x80] sm:$0xff] %v1315
          %1348 = vst [vmem:[%s131 + $0x88] sm:$0xff] %v1316
          %1349 = vst [vmem:[%s131 + $0x90] sm:$0xff] %v1317
          %1350 = vst [vmem:[%s131 + $0x98] sm:$0xff] %v1318
          %1351 = vst [vmem:[%s131 + $0xa0] sm:$0xff] %v1319
          %1352 = vst [vmem:[%s131 + $0xa8] sm:$0xff] %v1320
          %1353 = vst [vmem:[%s131 + $0xb0] sm:$0xff] %v1321
          %1354 = vst [vmem:[%s131 + $0xb8] sm:$0xff] %v1322
          %1355 = vst [vmem:[%s131 + $0xc0] sm:$0xff] %v1323
          %1356 = vst [vmem:[%s131 + $0xc8] sm:$0xff] %v1324
          %1357 = vst [vmem:[%s131 + $0xd0] sm:$0xff] %v1325
          %1358 = vst [vmem:[%s131 + $0xd8] sm:$0xff] %v1326
          %1359 = vst [vmem:[%s131 + $0xe0] sm:$0xff] %v1327
          %1360 = vst [vmem:[%s131 + $0xe8] sm:$0xff] %v1328
          %1361 = vst [vmem:[%s131 + $0xf0] sm:$0xff] %v1329
          %1362 = vst [vmem:[%s131 + $0xf8] sm:$0xff] %v1330
        $region57: #{tpu_custom_call.1} parent=23 // pred_fallthru
          _
        %s1363 = sand.u32 %s65, 1
        %s1364 = scalar_lea.sflag [#allocation7], %s1363
        %s1365 = sand.u32 %s65, 1
        %s1366 = smul.addr %s1365, 256
        %s1367 = scalar_lea.vmem [#allocation8], %s1366
        // Predicated region
        $region58: #{tpu_custom_call.1} parent=23 // pred_check
          %p1368 = pneg %p75
        $region59: #{tpu_custom_call.1} parent=23 // pred_check_branch
          %1370 = sbr.rel (%p1368) target = $region61
        $region60: #{tpu_custom_call.1} parent=23 // pred_region
          %s1371 = smul.u32 32, %s23
          %1373 = vsyncadd %s1364, 0
          %s1374 = smul.addr %s1371, 8
          %s1375 = scalar_lea.hbm %s2, %s1374
          %s1376 = sshll.u32 %s1367, 4
          %s1377 = int_to_ptr.vmem [resolvable:$true] %s1376
          %s1378 = sshll.u32 %s1375, 4
          %s1379 = int_to_ptr.hbm [resolvable:$true] %s1378
          %1384 = dma.vmem_to_hbm [thread:$0]  %s1377, 4096, %s1379, %s1364, 128, 128, 8
        $region61: #{tpu_custom_call.1} parent=23 // pred_fallthru
          _
      $region24: #{tpu_custom_call.1} parent=5 // pred_fallthru
        _
      %p1385 = scmp.le.s32.totalorder 2, %s12
      // Predicated region
      $region62: #{tpu_custom_call.1} parent=5 // pred_check
        %p1386 = pneg %p1385
      $region63: #{tpu_custom_call.1} parent=5 // pred_check_branch
        %1388 = sbr.rel (%p1386) target = $region65
      $region64: #{tpu_custom_call.1} parent=5 // pred_region
        %s1389 = ssub.s32 %s12, 2
        // Predicated region
        $region66: #{tpu_custom_call.1} parent=64 // pred_check
          %p1390 = pneg %p81
        $region67: #{tpu_custom_call.1} parent=64 // pred_check_branch
          %1392 = sbr.rel (%p1390) target = $region69
        $region68: #{tpu_custom_call.1} parent=64 // pred_region
          %s1393 = sand.u32 %s66, 1
          %s1394 = scalar_lea.sflag [#allocation7], %s1393
          %s1395 = sand.u32 %s66, 1
          %s1396 = smul.addr %s1395, 256
          %s1397 = scalar_lea.vmem [#allocation8], %s1396
          %1399 = dma.done %s1394, 4096
        $region69: #{tpu_custom_call.1} parent=64 // pred_fallthru
          _
      $region65: #{tpu_custom_call.1} parent=5 // pred_fallthru
        _
    $region6: #{tpu_custom_call.1} parent=1 // loop_footer
      %s16 = sadd.s32 1, %s12
    $region7: #{tpu_custom_call.1} parent=1 // loop_footer_branch
      %11 = sbr.rel target = $region3
    $region8: #{tpu_custom_call.1} parent=1 // loop_exit
      _
    %1400 = vsyncpa [#allocation6], 1
    %s1401 = scalar_lea.sflag [#allocation6], 1
    %1402 = vsyncpa %s1401, 1
    %1403 = vsyncpa [#allocation7], 1
    %s1404 = scalar_lea.sflag [#allocation7], 1
    %1405 = vsyncpa %s1404, 1

</llo_original>
